<compile_context>
chip_gen: v6e
topology: v6e:2x2x1
jax: 0.10.0
libtpu: 0.0.40
codegen_flags: <defaults>
</compile_context>

<pallas_src>
import functools
import math

import jax
import jax.numpy as jnp
from jax.experimental import pallas as pl
from jax.experimental.pallas import tpu as pltpu


# ----------------------------- Pallas kernel -------------------------------


def _stgnn_fused_kernel(x_ref, wpack_ref, cpack_ref, o_ref, *,
                        num_heads, num_layers, batch, seqlen, offs):
    """Fused forward: num_layers MHA self-attention layers + mean + fc.

    x_ref:     (N*L, E)           activation, row = n*L + i
    wpack_ref: (num_layers*4, E, E)  [Wq^T(scaled), Wk^T, Wv^T, Wo^T] per layer
    cpack_ref: (rows, 128)        biases / head mask / batch mask / fc params
    o_ref:     (L, 128)           lane-dense output (cols 0:2 are the logits)
    """
    E = x_ref.shape[-1]
    N, L, H = batch, seqlen, num_heads
    NL = N * L
    HL = H * L
    b_off, hm_off, bm_off, fw_off, fb_off = offs

    # Constants (loaded once, broadcast hoisted out of the layer loop).
    head_mask = cpack_ref[hm_off:hm_off + H, 0:E]                    # (H, E)
    hm_b = jnp.broadcast_to(head_mask[None, :, None, :], (N, H, L, E))
    batch_amask = cpack_ref[bm_off:bm_off + N * HL, 0:NL]            # (N*H*L, N*L)

    x = x_ref[...]                                                    # (N*L, E)

    for layer in range(num_layers):                                   # static unroll
        wq = wpack_ref[4 * layer + 0]                                 # (E, E)
        wk = wpack_ref[4 * layer + 1]
        wv = wpack_ref[4 * layer + 2]
        wo = wpack_ref[4 * layer + 3]
        r0 = b_off + 4 * layer
        bq = cpack_ref[r0 + 0:r0 + 1, 0:E]                            # (1, E)
        bk = cpack_ref[r0 + 1:r0 + 2, 0:E]
        bv = cpack_ref[r0 + 2:r0 + 3, 0:E]
        bo = cpack_ref[r0 + 3:r0 + 4, 0:E]

        # Projections (Q scale already folded into wq / bq).
        q = jnp.dot(x, wq, preferred_element_type=jnp.float32) + bq   # (N*L, E)
        k = jnp.dot(x, wk, preferred_element_type=jnp.float32) + bk
        v = jnp.dot(x, wv, preferred_element_type=jnp.float32) + bv

        # Expand Q rows over heads with a lane mask: row = n*H*L + h*L + i.
        # Pure VPU multiply + free reshapes (heads never leave the lane dim).
        q_big = (q.reshape(N, 1, L, E) * hm_b).reshape(N * HL, E)     # (N*H*L, E)

        # One score matmul for all (batch, head, query); cross-batch entries
        # are killed with the additive -1e30 mask before the softmax.
        s = jnp.einsum('qe,ke->qk', q_big, k,
                       preferred_element_type=jnp.float32)            # (N*H*L, N*L)
        s = s + batch_amask
        s = s - jnp.max(s, axis=-1, keepdims=True)
        p = jnp.exp(s)
        denom = jnp.sum(p, axis=-1, keepdims=True)
        r = pl.reciprocal(denom, approx=True)                         # EUP vrcp
        r = r * (2.0 - denom * r)                                     # one Newton step
        p = p * r

        # One P@V matmul for all (batch, head, query).
        o_big = jnp.dot(p, v, preferred_element_type=jnp.float32)     # (N*H*L, E)

        # Recombine heads: per output lane exactly one head contributes.
        attn = jnp.sum(o_big.reshape(N, H, L, E) * hm_b, axis=1)      # (N, L, E)

        # Single full-width out-projection.
        x = jnp.dot(attn.reshape(NL, E), wo,
                    preferred_element_type=jnp.float32) + bo          # (N*L, E)

    # torch: x.mean(dim=1) on (L, N, E)  ==  mean over the N axis here.
    m = jnp.mean(x.reshape(N, L, E), axis=0)                          # (L, E)
    fc_w = cpack_ref[fw_off:fw_off + E, :]                            # (E, 128) zero-padded
    fc_b = cpack_ref[fb_off:fb_off + 1, :]                            # (1, 128) zero-padded
    o_ref[...] = jnp.dot(m, fc_w, preferred_element_type=jnp.float32) + fc_b


# ------------------------------- wrappers -----------------------------------


def _align8(r):
    return ((r + 7) // 8) * 8


def _pad_lanes(a, width=128):
    a = jnp.asarray(a, jnp.float32)
    if a.ndim == 1:
        a = a[None, :]
    return jnp.pad(a, ((0, 0), (0, width - a.shape[1])))


def prepare_params(params, num_heads, batch, seqlen):
    """Torch-layout params -> 2 packed kernel arrays + static slice offsets."""
    fc_w = params["fc_w"].astype(jnp.float32)            # (out_dim, E)
    fc_b = params["fc_b"].astype(jnp.float32)            # (out_dim,)
    out_dim, E = fc_w.shape
    H = num_heads
    hd = E // H
    N, L = batch, seqlen
    num_layers = len(params["layers"])
    scale = 1.0 / math.sqrt(hd)

    # Square weights: pre-transposed, Q scale folded in.
    w_list, b_rows = [], []
    for (wqkv, bqkv, wo, bo) in params["layers"]:
        wqkv = wqkv.astype(jnp.float32)
        bqkv = bqkv.astype(jnp.float32)
        w_list += [(scale * wqkv[0:E]).T, wqkv[E:2 * E].T, wqkv[2 * E:3 * E].T,
                   wo.astype(jnp.float32).T]
        b_rows += [scale * bqkv[0:E], bqkv[E:2 * E], bqkv[2 * E:3 * E],
                   bo.astype(jnp.float32)]
    wpack = jnp.stack(w_list)                             # (num_layers*4, E, E)

    bias_mat = jnp.stack(b_rows)                          # (num_layers*4, E)
    head_mask = (jnp.arange(E)[None, :] // hd
                 == jnp.arange(H)[:, None]).astype(jnp.float32)        # (H, E)
    row_n = jnp.arange(N * H * L) // (H * L)
    col_n = jnp.arange(N * L) // L
    batch_mask = jnp.where(row_n[:, None] == col_n[None, :],
                           0.0, -1e30).astype(jnp.float32)             # (N*H*L, N*L)

    items = [("bias", bias_mat), ("head_mask", head_mask),
             ("batch_mask", batch_mask), ("fc_w", fc_w.T),
             ("fc_b", fc_b.reshape(1, out_dim))]
    sections, offs, cur = [], {}, 0
    for name, mat in items:
        start = _align8(cur)
        if start != cur:
            sections.append(jnp.zeros((start - cur, 128), jnp.float32))
        offs[name] = start
        pm = _pad_lanes(mat)
        sections.append(pm)
        cur = start + pm.shape[0]
    end = _align8(cur)
    if end != cur:
        sections.append(jnp.zeros((end - cur, 128), jnp.float32))
    cpack = jnp.concatenate(sections, axis=0)             # (rows, 128)

    return {
        "wpack": wpack,
        "cpack": cpack,
        "num_layers": num_layers,
        "out_dim": out_dim,
        "offs": (offs["bias"], offs["head_mask"], offs["batch_mask"],
                 offs["fc_w"], offs["fc_b"]),
    }


def stgnn_forward(x_lne, prep, num_heads):
    """x_lne: (L, N, E) exactly as the PyTorch module receives it -> (L, 2)."""
    L, N, E = x_lne.shape
    # Flatten to the kernel's (N*L, E) layout in the wrapper (fuses in XLA).
    x2d = jnp.transpose(x_lne, (1, 0, 2)).reshape(N * L, E)

    kernel = functools.partial(
        _stgnn_fused_kernel,
        num_heads=num_heads, num_layers=prep["num_layers"],
        batch=N, seqlen=L, offs=prep["offs"])

    vmem = pl.BlockSpec(memory_space=pltpu.MemorySpace.VMEM)
    out = pl.pallas_call(
        kernel,
        out_shape=jax.ShapeDtypeStruct((L, 128), jnp.float32),   # lane-dense store
        in_specs=[vmem, vmem, vmem],
        out_specs=vmem,
    )(x2d, prep["wpack"], prep["cpack"])
    return out[:, :prep["out_dim"]]


# -------------------------- pure-JAX reference -------------------------------


def _mha_ref(x_lne, wqkv, bqkv, wo, bo, num_heads):
    L, N, E = x_lne.shape
    hd = E // num_heads
    q = x_lne @ wqkv[0:E].T + bqkv[0:E]
    k = x_lne @ wqkv[E:2 * E].T + bqkv[E:2 * E]
    v = x_lne @ wqkv[2 * E:].T + bqkv[2 * E:]

    def split_heads(t):
        return t.reshape(L, N * num_heads, hd).transpose(1, 0, 2)

    qh, kh, vh = split_heads(q), split_heads(k), split_heads(v)
    s = (qh / math.sqrt(hd)) @ kh.transpose(0, 2, 1)
    p = jax.nn.softmax(s, axis=-1)
    o = (p @ vh).transpose(1, 0, 2).reshape(L, N, E)
    return o @ wo.T + bo


def stgnn_ref(x_lne, params, num_heads):
    x = x_lne
    for (wqkv, bqkv, wo, bo) in params["layers"]:
        x = _mha_ref(x, wqkv, bqkv, wo, bo, num_heads)
    m = jnp.mean(x, axis=1)                      # torch: x.mean(dim=1) -> (L, E)
    return m @ params["fc_w"].T + params["fc_b"]


# --------------------------------- main --------------------------------------


def init_params(key, embed_dim, num_layers):
    layers = []
    for _ in range(num_layers):
        key, k1, k2, k3, k4 = jax.random.split(key, 5)
        wqkv = 0.1 * jax.random.normal(k1, (3 * embed_dim, embed_dim), jnp.float32)
        bqkv = 0.1 * jax.random.normal(k2, (3 * embed_dim,), jnp.float32)
        wo = 0.1 * jax.random.normal(k3, (embed_dim, embed_dim), jnp.float32)
        bo = 0.1 * jax.random.normal(k4, (embed_dim,), jnp.float32)
        layers.append((wqkv, bqkv, wo, bo))
    key, k5, k6 = jax.random.split(key, 3)
    fc_w = 0.1 * jax.random.normal(k5, (2, embed_dim), jnp.float32)
    fc_b = 0.1 * jax.random.normal(k6, (2,), jnp.float32)
    return {"layers": layers, "fc_w": fc_w, "fc_b": fc_b}


if __name__ == "__main__":
    L, N, E = 8, 2, 32            # seq, batch, input_dim
    NUM_HEADS, NUM_LAYERS = 4, 2

    root = jax.random.PRNGKey(0)
    kx, kp = jax.random.split(root)
    x = jax.random.normal(kx, (L, N, E), jnp.float32)   # (L, N, E) torch layout
    params = init_params(kp, E, NUM_LAYERS)
    prep = prepare_params(params, NUM_HEADS, batch=N, seqlen=L)

    out = stgnn_forward(x, prep, NUM_HEADS)
    out = jax.block_until_ready(out)

    ref = stgnn_ref(x, params, NUM_HEADS)
    assert out.shape == (L, 2)
    assert jnp.allclose(out, ref, atol=1e-4, rtol=1e-4), (
        f"max abs diff {jnp.max(jnp.abs(out - ref))}")

    print("KERNEL_OK")
</pallas_src>

<mosaic_0001>
module attributes {stable_mosaic.version = 11 : i64} {
  func.func @_stgnn_fused_kernel(%arg0: memref<16x32xf32, #tpu.memory_space<vmem>>, %arg1: memref<8x32x32xf32, #tpu.memory_space<vmem>>, %arg2: memref<120x128xf32, #tpu.memory_space<vmem>>, %arg3: memref<8x128xf32, #tpu.memory_space<vmem>>) attributes {dimension_semantics = [], scalar_prefetch = 0 : i64, scratch_operands = 0 : i64, tpu.core_type = #tpu.core_type<tc>} {
    %c8 = arith.constant 8 : index
    %c0 = arith.constant 0 : index
    %0 = vector.load %arg2[%c8, %c0] : memref<120x128xf32, #tpu.memory_space<vmem>>, vector<4x32xf32>
    %1 = vector.shape_cast %0 : vector<4x32xf32> to vector<1x4x1x32xf32>
    %2 = vector.shape_cast %1 : vector<1x4x1x32xf32> to vector<1x4x1x32xf32>
    %3 = vector.broadcast %2 : vector<1x4x1x32xf32> to vector<2x4x8x32xf32>
    %c16 = arith.constant 16 : index
    %c0_0 = arith.constant 0 : index
    %4 = vector.load %arg2[%c16, %c0_0] : memref<120x128xf32, #tpu.memory_space<vmem>>, vector<64x16xf32>
    %c0_1 = arith.constant 0 : index
    %c0_2 = arith.constant 0 : index
    %5 = vector.load %arg0[%c0_1, %c0_2] : memref<16x32xf32, #tpu.memory_space<vmem>>, vector<16x32xf32>
    %c0_3 = arith.constant 0 : index
    %c0_4 = arith.constant 0 : index
    %c0_5 = arith.constant 0 : index
    %6 = vector.load %arg1[%c0_3, %c0_4, %c0_5] : memref<8x32x32xf32, #tpu.memory_space<vmem>>, vector<1x32x32xf32>
    %7 = vector.shape_cast %6 : vector<1x32x32xf32> to vector<32x32xf32>
    %c1 = arith.constant 1 : index
    %c0_6 = arith.constant 0 : index
    %c0_7 = arith.constant 0 : index
    %8 = vector.load %arg1[%c1, %c0_6, %c0_7] : memref<8x32x32xf32, #tpu.memory_space<vmem>>, vector<1x32x32xf32>
    %9 = vector.shape_cast %8 : vector<1x32x32xf32> to vector<32x32xf32>
    %c2 = arith.constant 2 : index
    %c0_8 = arith.constant 0 : index
    %c0_9 = arith.constant 0 : index
    %10 = vector.load %arg1[%c2, %c0_8, %c0_9] : memref<8x32x32xf32, #tpu.memory_space<vmem>>, vector<1x32x32xf32>
    %11 = vector.shape_cast %10 : vector<1x32x32xf32> to vector<32x32xf32>
    %c3 = arith.constant 3 : index
    %c0_10 = arith.constant 0 : index
    %c0_11 = arith.constant 0 : index
    %12 = vector.load %arg1[%c3, %c0_10, %c0_11] : memref<8x32x32xf32, #tpu.memory_space<vmem>>, vector<1x32x32xf32>
    %13 = vector.shape_cast %12 : vector<1x32x32xf32> to vector<32x32xf32>
    %c0_12 = arith.constant 0 : index
    %c0_13 = arith.constant 0 : index
    %14 = vector.load %arg2[%c0_12, %c0_13] : memref<120x128xf32, #tpu.memory_space<vmem>>, vector<1x32xf32>
    %c1_14 = arith.constant 1 : index
    %c0_15 = arith.constant 0 : index
    %15 = vector.load %arg2[%c1_14, %c0_15] : memref<120x128xf32, #tpu.memory_space<vmem>>, vector<1x32xf32>
    %c2_16 = arith.constant 2 : index
    %c0_17 = arith.constant 0 : index
    %16 = vector.load %arg2[%c2_16, %c0_17] : memref<120x128xf32, #tpu.memory_space<vmem>>, vector<1x32xf32>
    %c3_18 = arith.constant 3 : index
    %c0_19 = arith.constant 0 : index
    %17 = vector.load %arg2[%c3_18, %c0_19] : memref<120x128xf32, #tpu.memory_space<vmem>>, vector<1x32xf32>
    %cst = arith.constant dense<0.000000e+00> : vector<16x32xf32>
    %18 = tpu.matmul %5, %7, %cst {dimension_numbers = #tpu.dot_dimension_numbers<[1], [0], [0], [1], [0, 0, 1, 1], [], []>} : vector<16x32xf32>, vector<32x32xf32>, vector<16x32xf32> -> vector<16x32xf32>
    %19 = vector.broadcast %14 : vector<1x32xf32> to vector<16x32xf32>
    %20 = arith.addf %18, %19 : vector<16x32xf32>
    %cst_20 = arith.constant dense<0.000000e+00> : vector<16x32xf32>
    %21 = tpu.matmul %5, %9, %cst_20 {dimension_numbers = #tpu.dot_dimension_numbers<[1], [0], [0], [1], [0, 0, 1, 1], [], []>} : vector<16x32xf32>, vector<32x32xf32>, vector<16x32xf32> -> vector<16x32xf32>
    %22 = vector.broadcast %15 : vector<1x32xf32> to vector<16x32xf32>
    %23 = arith.addf %21, %22 : vector<16x32xf32>
    %cst_21 = arith.constant dense<0.000000e+00> : vector<16x32xf32>
    %24 = tpu.matmul %5, %11, %cst_21 {dimension_numbers = #tpu.dot_dimension_numbers<[1], [0], [0], [1], [0, 0, 1, 1], [], []>} : vector<16x32xf32>, vector<32x32xf32>, vector<16x32xf32> -> vector<16x32xf32>
    %25 = vector.broadcast %16 : vector<1x32xf32> to vector<16x32xf32>
    %26 = arith.addf %24, %25 : vector<16x32xf32>
    %27 = vector.shape_cast %20 : vector<16x32xf32> to vector<2x1x8x32xf32>
    %28 = vector.broadcast %27 : vector<2x1x8x32xf32> to vector<2x4x8x32xf32>
    %29 = arith.mulf %28, %3 : vector<2x4x8x32xf32>
    %30 = vector.shape_cast %29 : vector<2x4x8x32xf32> to vector<64x32xf32>
    "tpu.trace_start"() <{level = 10 : i32, message = "qe,ke->qk"}> : () -> ()
    %cst_22 = arith.constant dense<0.000000e+00> : vector<64x16xf32>
    %31 = tpu.matmul %30, %23, %cst_22 {dimension_numbers = #tpu.dot_dimension_numbers<[1], [1], [0], [0], [0, 0, 1, 0], [], []>} : vector<64x32xf32>, vector<16x32xf32>, vector<64x16xf32> -> vector<64x16xf32>
    "tpu.trace_stop"() : () -> ()
    %32 = arith.addf %31, %4 : vector<64x16xf32>
    %cst_23 = arith.constant dense<0xFF800000> : vector<64xf32>
    %33 = vector.multi_reduction <maximumf>, %32, %cst_23 [1] : vector<64x16xf32> to vector<64xf32>
    %34 = vector.shape_cast %33 : vector<64xf32> to vector<64x1xf32>
    %35 = vector.broadcast %34 : vector<64x1xf32> to vector<64x16xf32>
    %36 = arith.subf %32, %35 : vector<64x16xf32>
    %37 = math.exp %36 : vector<64x16xf32>
    %cst_24 = arith.constant dense<0.000000e+00> : vector<64xf32>
    %38 = vector.multi_reduction <add>, %37, %cst_24 [1] : vector<64x16xf32> to vector<64xf32>
    %39 = vector.shape_cast %38 : vector<64xf32> to vector<64x1xf32>
    %40 = tpu.reciprocal %39 {approx = true} : vector<64x1xf32> -> vector<64x1xf32>
    %41 = arith.mulf %39, %40 : vector<64x1xf32>
    %cst_25 = arith.constant 2.000000e+00 : f32
    %42 = vector.broadcast %cst_25 : f32 to vector<64x1xf32>
    %43 = arith.subf %42, %41 : vector<64x1xf32>
    %44 = arith.mulf %40, %43 : vector<64x1xf32>
    %45 = vector.broadcast %44 : vector<64x1xf32> to vector<64x16xf32>
    %46 = arith.mulf %37, %45 : vector<64x16xf32>
    %cst_26 = arith.constant dense<0.000000e+00> : vector<64x32xf32>
    %47 = tpu.matmul %46, %26, %cst_26 {dimension_numbers = #tpu.dot_dimension_numbers<[1], [0], [0], [1], [0, 0, 1, 1], [], []>} : vector<64x16xf32>, vector<16x32xf32>, vector<64x32xf32> -> vector<64x32xf32>
    %48 = vector.shape_cast %47 : vector<64x32xf32> to vector<2x4x8x32xf32>
    %49 = arith.mulf %48, %3 : vector<2x4x8x32xf32>
    %cst_27 = arith.constant dense<0.000000e+00> : vector<2x8x32xf32>
    %50 = vector.multi_reduction <add>, %49, %cst_27 [1] : vector<2x4x8x32xf32> to vector<2x8x32xf32>
    %51 = vector.shape_cast %50 : vector<2x8x32xf32> to vector<16x32xf32>
    %cst_28 = arith.constant dense<0.000000e+00> : vector<16x32xf32>
    %52 = tpu.matmul %51, %13, %cst_28 {dimension_numbers = #tpu.dot_dimension_numbers<[1], [0], [0], [1], [0, 0, 1, 1], [], []>} : vector<16x32xf32>, vector<32x32xf32>, vector<16x32xf32> -> vector<16x32xf32>
    %53 = vector.broadcast %17 : vector<1x32xf32> to vector<16x32xf32>
    %54 = arith.addf %52, %53 : vector<16x32xf32>
    %c4 = arith.constant 4 : index
    %c0_29 = arith.constant 0 : index
    %c0_30 = arith.constant 0 : index
    %55 = vector.load %arg1[%c4, %c0_29, %c0_30] : memref<8x32x32xf32, #tpu.memory_space<vmem>>, vector<1x32x32xf32>
    %56 = vector.shape_cast %55 : vector<1x32x32xf32> to vector<32x32xf32>
    %c5 = arith.constant 5 : index
    %c0_31 = arith.constant 0 : index
    %c0_32 = arith.constant 0 : index
    %57 = vector.load %arg1[%c5, %c0_31, %c0_32] : memref<8x32x32xf32, #tpu.memory_space<vmem>>, vector<1x32x32xf32>
    %58 = vector.shape_cast %57 : vector<1x32x32xf32> to vector<32x32xf32>
    %c6 = arith.constant 6 : index
    %c0_33 = arith.constant 0 : index
    %c0_34 = arith.constant 0 : index
    %59 = vector.load %arg1[%c6, %c0_33, %c0_34] : memref<8x32x32xf32, #tpu.memory_space<vmem>>, vector<1x32x32xf32>
    %60 = vector.shape_cast %59 : vector<1x32x32xf32> to vector<32x32xf32>
    %c7 = arith.constant 7 : index
    %c0_35 = arith.constant 0 : index
    %c0_36 = arith.constant 0 : index
    %61 = vector.load %arg1[%c7, %c0_35, %c0_36] : memref<8x32x32xf32, #tpu.memory_space<vmem>>, vector<1x32x32xf32>
    %62 = vector.shape_cast %61 : vector<1x32x32xf32> to vector<32x32xf32>
    %c4_37 = arith.constant 4 : index
    %c0_38 = arith.constant 0 : index
    %63 = vector.load %arg2[%c4_37, %c0_38] : memref<120x128xf32, #tpu.memory_space<vmem>>, vector<1x32xf32>
    %c5_39 = arith.constant 5 : index
    %c0_40 = arith.constant 0 : index
    %64 = vector.load %arg2[%c5_39, %c0_40] : memref<120x128xf32, #tpu.memory_space<vmem>>, vector<1x32xf32>
    %c6_41 = arith.constant 6 : index
    %c0_42 = arith.constant 0 : index
    %65 = vector.load %arg2[%c6_41, %c0_42] : memref<120x128xf32, #tpu.memory_space<vmem>>, vector<1x32xf32>
    %c7_43 = arith.constant 7 : index
    %c0_44 = arith.constant 0 : index
    %66 = vector.load %arg2[%c7_43, %c0_44] : memref<120x128xf32, #tpu.memory_space<vmem>>, vector<1x32xf32>
    %cst_45 = arith.constant dense<0.000000e+00> : vector<16x32xf32>
    %67 = tpu.matmul %54, %56, %cst_45 {dimension_numbers = #tpu.dot_dimension_numbers<[1], [0], [0], [1], [0, 0, 1, 1], [], []>} : vector<16x32xf32>, vector<32x32xf32>, vector<16x32xf32> -> vector<16x32xf32>
    %68 = vector.broadcast %63 : vector<1x32xf32> to vector<16x32xf32>
    %69 = arith.addf %67, %68 : vector<16x32xf32>
    %cst_46 = arith.constant dense<0.000000e+00> : vector<16x32xf32>
    %70 = tpu.matmul %54, %58, %cst_46 {dimension_numbers = #tpu.dot_dimension_numbers<[1], [0], [0], [1], [0, 0, 1, 1], [], []>} : vector<16x32xf32>, vector<32x32xf32>, vector<16x32xf32> -> vector<16x32xf32>
    %71 = vector.broadcast %64 : vector<1x32xf32> to vector<16x32xf32>
    %72 = arith.addf %70, %71 : vector<16x32xf32>
    %cst_47 = arith.constant dense<0.000000e+00> : vector<16x32xf32>
    %73 = tpu.matmul %54, %60, %cst_47 {dimension_numbers = #tpu.dot_dimension_numbers<[1], [0], [0], [1], [0, 0, 1, 1], [], []>} : vector<16x32xf32>, vector<32x32xf32>, vector<16x32xf32> -> vector<16x32xf32>
    %74 = vector.broadcast %65 : vector<1x32xf32> to vector<16x32xf32>
    %75 = arith.addf %73, %74 : vector<16x32xf32>
    %76 = vector.shape_cast %69 : vector<16x32xf32> to vector<2x1x8x32xf32>
    %77 = vector.broadcast %76 : vector<2x1x8x32xf32> to vector<2x4x8x32xf32>
    %78 = arith.mulf %77, %3 : vector<2x4x8x32xf32>
    %79 = vector.shape_cast %78 : vector<2x4x8x32xf32> to vector<64x32xf32>
    "tpu.trace_start"() <{level = 10 : i32, message = "qe,ke->qk"}> : () -> ()
    %cst_48 = arith.constant dense<0.000000e+00> : vector<64x16xf32>
    %80 = tpu.matmul %79, %72, %cst_48 {dimension_numbers = #tpu.dot_dimension_numbers<[1], [1], [0], [0], [0, 0, 1, 0], [], []>} : vector<64x32xf32>, vector<16x32xf32>, vector<64x16xf32> -> vector<64x16xf32>
    "tpu.trace_stop"() : () -> ()
    %81 = arith.addf %80, %4 : vector<64x16xf32>
    %cst_49 = arith.constant dense<0xFF800000> : vector<64xf32>
    %82 = vector.multi_reduction <maximumf>, %81, %cst_49 [1] : vector<64x16xf32> to vector<64xf32>
    %83 = vector.shape_cast %82 : vector<64xf32> to vector<64x1xf32>
    %84 = vector.broadcast %83 : vector<64x1xf32> to vector<64x16xf32>
    %85 = arith.subf %81, %84 : vector<64x16xf32>
    %86 = math.exp %85 : vector<64x16xf32>
    %cst_50 = arith.constant dense<0.000000e+00> : vector<64xf32>
    %87 = vector.multi_reduction <add>, %86, %cst_50 [1] : vector<64x16xf32> to vector<64xf32>
    %88 = vector.shape_cast %87 : vector<64xf32> to vector<64x1xf32>
    %89 = tpu.reciprocal %88 {approx = true} : vector<64x1xf32> -> vector<64x1xf32>
    %90 = arith.mulf %88, %89 : vector<64x1xf32>
    %cst_51 = arith.constant 2.000000e+00 : f32
    %91 = vector.broadcast %cst_51 : f32 to vector<64x1xf32>
    %92 = arith.subf %91, %90 : vector<64x1xf32>
    %93 = arith.mulf %89, %92 : vector<64x1xf32>
    %94 = vector.broadcast %93 : vector<64x1xf32> to vector<64x16xf32>
    %95 = arith.mulf %86, %94 : vector<64x16xf32>
    %cst_52 = arith.constant dense<0.000000e+00> : vector<64x32xf32>
    %96 = tpu.matmul %95, %75, %cst_52 {dimension_numbers = #tpu.dot_dimension_numbers<[1], [0], [0], [1], [0, 0, 1, 1], [], []>} : vector<64x16xf32>, vector<16x32xf32>, vector<64x32xf32> -> vector<64x32xf32>
    %97 = vector.shape_cast %96 : vector<64x32xf32> to vector<2x4x8x32xf32>
    %98 = arith.mulf %97, %3 : vector<2x4x8x32xf32>
    %cst_53 = arith.constant dense<0.000000e+00> : vector<2x8x32xf32>
    %99 = vector.multi_reduction <add>, %98, %cst_53 [1] : vector<2x4x8x32xf32> to vector<2x8x32xf32>
    %100 = vector.shape_cast %99 : vector<2x8x32xf32> to vector<16x32xf32>
    %cst_54 = arith.constant dense<0.000000e+00> : vector<16x32xf32>
    %101 = tpu.matmul %100, %62, %cst_54 {dimension_numbers = #tpu.dot_dimension_numbers<[1], [0], [0], [1], [0, 0, 1, 1], [], []>} : vector<16x32xf32>, vector<32x32xf32>, vector<16x32xf32> -> vector<16x32xf32>
    %102 = vector.broadcast %66 : vector<1x32xf32> to vector<16x32xf32>
    %103 = arith.addf %101, %102 : vector<16x32xf32>
    %104 = vector.shape_cast %103 : vector<16x32xf32> to vector<2x8x32xf32>
    %cst_55 = arith.constant dense<0.000000e+00> : vector<8x32xf32>
    %105 = vector.multi_reduction <add>, %104, %cst_55 [0] : vector<2x8x32xf32> to vector<8x32xf32>
    %cst_56 = arith.constant 2.000000e+00 : f32
    %106 = vector.broadcast %cst_56 : f32 to vector<8x32xf32>
    %107 = arith.divf %105, %106 : vector<8x32xf32>
    %c80 = arith.constant 80 : index
    %c0_57 = arith.constant 0 : index
    %108 = vector.load %arg2[%c80, %c0_57] : memref<120x128xf32, #tpu.memory_space<vmem>>, vector<32x128xf32>
    %c112 = arith.constant 112 : index
    %c0_58 = arith.constant 0 : index
    %109 = vector.load %arg2[%c112, %c0_58] : memref<120x128xf32, #tpu.memory_space<vmem>>, vector<1x128xf32>
    %cst_59 = arith.constant dense<0.000000e+00> : vector<8x128xf32>
    %110 = tpu.matmul %107, %108, %cst_59 {dimension_numbers = #tpu.dot_dimension_numbers<[1], [0], [0], [1], [0, 0, 1, 1], [], []>} : vector<8x32xf32>, vector<32x128xf32>, vector<8x128xf32> -> vector<8x128xf32>
    %111 = vector.broadcast %109 : vector<1x128xf32> to vector<8x128xf32>
    %112 = arith.addf %110, %111 : vector<8x128xf32>
    %c0_60 = arith.constant 0 : index
    %c0_61 = arith.constant 0 : index
    %113 = vector.load %arg3[%c0_60, %c0_61] : memref<8x128xf32, #tpu.memory_space<vmem>>, vector<8x128xf32>
    tpu.vector_store %arg3[%c0_60, %c0_61], %112 {strides = array<i32>} : memref<8x128xf32, #tpu.memory_space<vmem>>, vector<8x128xf32>,
    return
  }
}

</mosaic_0001>

<llo_original>
// kernel: tpu_custom_call.1
$region0: #{tpu_custom_call.1}
  #allocation0 [shape = 'u32[]', space=smem, size = 0x4, offset = 0x4, fixed_abs, tag = 'smem constant byte address 0x4 - core index']
  #allocation1 [shape = 'u32[144,128]{1,0:T(1,128)}', space=vmem, size = 0x12000, scoped, tag = 'internal scratch']
  %s0 = inlined_call_operand.hbm [shape: f32[16,32], index: 0, kind: input, shape index: {}]
  %s1 = inlined_call_operand.hbm [shape: f32[8,32,32], index: 1, kind: input, shape index: {}]
  %s2 = inlined_call_operand.hbm [shape: f32[120,128], index: 2, kind: input, shape index: {}]
  %s3 = inlined_call_operand.hbm [shape: f32[8,128], index: 3, kind: output, shape index: {}]
  %s4 = sld [smem:[#allocation0]]
  $region34: #{tpu_custom_call.1} parent=0
    _
  %s6 = ssub.s32 1, %s4
  %s7 = scalar_select 0, %s6, %s4
  $region1: #{tpu_custom_call.1} parent=0
    #allocation2 [shape = 'u8[8192]{0}', space=vmem, size = 0x2000, scoped, tag = 'input window, operand 0, single buffered']
    #allocation3 [shape = 's32[1]{0}', space=sflag, size = 0x4, scoped, tag = 'scoped memory for tpu_custom_call.1']
    #allocation4 [shape = 's32[1]{0}', space=sflag, size = 0x4, scoped, tag = 'scoped memory for tpu_custom_call.1']
    #allocation5 [shape = 'u8[131072]{0}', space=vmem, size = 0x20000, scoped, tag = 'input window, operand 1, single buffered']
    #allocation6 [shape = 's32[1]{0}', space=sflag, size = 0x4, scoped, tag = 'scoped memory for tpu_custom_call.1']
    #allocation7 [shape = 'u8[61440]{0}', space=vmem, size = 0xf000, scoped, tag = 'input window, operand 2, single buffered']
    #allocation8 [shape = 'u8[4096]{0}', space=vmem, size = 0x1000, scoped, tag = 'output window, operand 0, single buffered']
    %8 = vsyncpa [#allocation3], 0
    %9 = vsyncpa [#allocation6], 0
    %10 = vsyncpa [#allocation4], 0
    // Predicated region
    $region2: #{tpu_custom_call.1} parent=1 // pred_check
      _
    $region3: #{tpu_custom_call.1} parent=1 // pred_check_branch
      %12 = sbr.rel (0) target = $region5
    $region4: #{tpu_custom_call.1} parent=1 // pred_region
      %s14 = ssub.s32 256, 256
      %15 = vsyncadd [#allocation3], %s14
      %s16 = sshll.u32 [#allocation2], 4
      %s17 = int_to_ptr.vmem [resolvable:$true] %s16
      %22 = dma.hbm_to_vmem [thread:$0]  %s0, 256, %s17, [#allocation3], 128, 128, 8
    $region5: #{tpu_custom_call.1} parent=1 // pred_fallthru
      _
    // Predicated region
    $region6: #{tpu_custom_call.1} parent=1 // pred_check
      _
    $region7: #{tpu_custom_call.1} parent=1 // pred_check_branch
      %24 = sbr.rel (0) target = $region9
    $region8: #{tpu_custom_call.1} parent=1 // pred_region
      %s26 = ssub.s32 4096, 4096
      %27 = vsyncadd [#allocation6], %s26
      %s28 = sshll.u32 [#allocation5], 4
      %s29 = int_to_ptr.vmem [resolvable:$true] %s28
      %34 = dma.hbm_to_vmem [thread:$0]  %s1, 4096, %s29, [#allocation6], 128, 128, 8
    $region9: #{tpu_custom_call.1} parent=1 // pred_fallthru
      _
    // Predicated region
    $region10: #{tpu_custom_call.1} parent=1 // pred_check
      _
    $region11: #{tpu_custom_call.1} parent=1 // pred_check_branch
      %36 = sbr.rel (0) target = $region13
    $region12: #{tpu_custom_call.1} parent=1 // pred_region
      %s38 = ssub.s32 1920, 1920
      %39 = vsyncadd [#allocation6], %s38
      %s40 = sshll.u32 [#allocation7], 4
      %s41 = int_to_ptr.vmem [resolvable:$true] %s40
      %46 = dma.hbm_to_vmem [thread:$0]  %s2, 1920, %s41, [#allocation6], 128, 128, 8
    $region13: #{tpu_custom_call.1} parent=1 // pred_fallthru
      _
    // Predicated region
    $region14: #{tpu_custom_call.1} parent=1 // pred_check
      _
    $region15: #{tpu_custom_call.1} parent=1 // pred_check_branch
      %48 = sbr.rel (0) target = $region17
    $region16: #{tpu_custom_call.1} parent=1 // pred_region
      %49 = dma.done [#allocation3], 256
    $region17: #{tpu_custom_call.1} parent=1 // pred_fallthru
      _
    // Predicated region
    $region18: #{tpu_custom_call.1} parent=1 // pred_check
      _
    $region19: #{tpu_custom_call.1} parent=1 // pred_check_branch
      %51 = sbr.rel (0) target = $region21
    $region20: #{tpu_custom_call.1} parent=1 // pred_region
      %52 = dma.done [#allocation6], 4096
    $region21: #{tpu_custom_call.1} parent=1 // pred_fallthru
      _
    // Predicated region
    $region22: #{tpu_custom_call.1} parent=1 // pred_check
      _
    $region23: #{tpu_custom_call.1} parent=1 // pred_check_branch
      %54 = sbr.rel (0) target = $region25
    $region24: #{tpu_custom_call.1} parent=1 // pred_region
      %55 = dma.done [#allocation6], 1920
    $region25: #{tpu_custom_call.1} parent=1 // pred_fallthru
      _
    %v56 = vld [vmem:[#allocation7 + $0x8] sm:$0xf]
    %v59 = vunpack.c.l.s4 1966171168
    %v60 = vunpack.c.0.s8 %v59
    %v61 = vlaneseq
    %v62 = vshrl.u32 %v61, 7
    %v63 = vsub.s32 %v60, %v62
    %v64 = vrot.slane %v56, %v63
    %v65 = vcombine.high %v64, %v64
    %v67 = vunpack.c.l.s4 1966171168
    %v68 = vunpack.c.0.s8 %v67
    %v69 = vlaneseq
    %v70 = vshrl.u32 %v69, 7
    %v71 = vsub.s32 %v68, %v70
    %v72 = vrot.slane %v64, %v71
    %v74 = vunpack.c.l.s4 1966171168
    %v75 = vunpack.c.0.s8 %v74
    %v76 = vlaneseq
    %v77 = vshrl.u32 %v76, 7
    %v78 = vsub.s32 %v75, %v77
    %v79 = vrot.slane %v65, %v78
    %v80 = vcombine.high %v72, %v72
    %v81 = vcombine.high %v79, %v79
    %v82 = vlaneseq
    %v83 = vshrl.u32 %v82, 7
    %v84 = vsub.s32 0, %v83
    %v85 = vrot.slane %v72, %v84
    %v86 = vlaneseq
    %v87 = vshrl.u32 %v86, 7
    %v88 = vsub.s32 0, %v87
    %v89 = vrot.slane %v79, %v88
    %v90 = vlaneseq
    %v91 = vshrl.u32 %v90, 7
    %v92 = vsub.s32 0, %v91
    %v93 = vrot.slane %v80, %v92
    %v94 = vlaneseq
    %v95 = vshrl.u32 %v94, 7
    %v96 = vsub.s32 0, %v95
    %v97 = vrot.slane %v81, %v96
    %v102 = vld [vmem:[#allocation7 + $0x10] sm:$0xff]
    %v103 = vld [vmem:[#allocation7 + $0x18] sm:$0xff]
    %v104 = vld [vmem:[#allocation7 + $0x20] sm:$0xff]
    %v105 = vld [vmem:[#allocation7 + $0x28] sm:$0xff]
    %v106 = vld [vmem:[#allocation7 + $0x30] sm:$0xff]
    %v107 = vld [vmem:[#allocation7 + $0x38] sm:$0xff]
    %v108 = vld [vmem:[#allocation7 + $0x40] sm:$0xff]
    %v109 = vld [vmem:[#allocation7 + $0x48] sm:$0xff]
    %v110 = vld [vmem:[#allocation2] sm:$0xff]
    %v111 = vld [vmem:[#allocation2 + $0x8] sm:$0xff]
    %v112 = vld [vmem:[#allocation5] sm:$0xff]
    %v113 = vld [vmem:[#allocation5 + $0x8] sm:$0xff]
    %v114 = vld [vmem:[#allocation5 + $0x10] sm:$0xff]
    %v115 = vld [vmem:[#allocation5 + $0x18] sm:$0xff]
    %s116 = scalar_lea.vmem [#allocation5], 32
    %v117 = vld [vmem:[%s116] sm:$0xff]
    %v118 = vld [vmem:[%s116 + $0x8] sm:$0xff]
    %v119 = vld [vmem:[%s116 + $0x10] sm:$0xff]
    %v120 = vld [vmem:[%s116 + $0x18] sm:$0xff]
    %s121 = scalar_lea.vmem [#allocation5], 64
    %v122 = vld [vmem:[%s121] sm:$0xff]
    %v123 = vld [vmem:[%s121 + $0x8] sm:$0xff]
    %v124 = vld [vmem:[%s121 + $0x10] sm:$0xff]
    %v125 = vld [vmem:[%s121 + $0x18] sm:$0xff]
    %s126 = scalar_lea.vmem [#allocation5], 96
    %v127 = vld [vmem:[%s126] sm:$0xff]
    %v128 = vld [vmem:[%s126 + $0x8] sm:$0xff]
    %v129 = vld [vmem:[%s126 + $0x10] sm:$0xff]
    %v130 = vld [vmem:[%s126 + $0x18] sm:$0xff]
    %v131 = vld [vmem:[#allocation7] sm:$0x1]
    %v132 = vld [vmem:[#allocation7 + $0x1] sm:$0x1]
    %v133 = vld [vmem:[#allocation7 + $0x2] sm:$0x1]
    %v134 = vld [vmem:[#allocation7 + $0x3] sm:$0x1]
    %v135 = vlaneseq
    %v136 = vshrl.u32 %v135, 7
    %v137 = vsub.s32 0, %v136
    %v138 = vrot.slane %v131, %v137
    %vm139 = vcmask 261120
    %v141 = vsel %vm139, %v110, 0
    %v144 = vsel %vm139, %v111, 0
    %146 = vmatprep.subr.mxu0 0.0
    %147 = vmatpush1.msra.mxu0 0.0
    %148 = vmatprep.subr.mxu0 0.0
    %149 = vmatpush1.msra.mxu0 0.0
    %150 = vmatprep.subr.mxu0 0.0
    %151 = vmatpush1.msra.mxu0 0.0
    %152 = vmatprep.subr.mxu0 0.0
    %153 = vmatpush1.msra.mxu0 0.0
    %154 = vmatprep.subr.mxu0 0.0
    %155 = vmatpush1.msra.mxu0 0.0
    %156 = vmatprep.subr.mxu0 0.0
    %157 = vmatpush1.msra.mxu0 0.0
    %158 = vmatprep.subr.mxu0 0.0
    %159 = vmatpush1.msra.mxu0 0.0
    %160 = vmatprep.subr.mxu0 0.0
    %161 = vmatpush1.msra.mxu0 0.0
    %162 = vmatprep.subr.mxu0 0.0
    %163 = vmatpush1.msra.mxu0 0.0
    %164 = vmatprep.subr.mxu0 0.0
    %165 = vmatpush1.msra.mxu0 0.0
    %166 = vmatprep.subr.mxu0 0.0
    %167 = vmatpush1.msra.mxu0 0.0
    %168 = vmatprep.subr.mxu0 0.0
    %169 = vmatpush1.msra.mxu0 0.0
    %170 = vmatprep.subr.mxu0 0.0
    %171 = vmatpush1.msra.mxu0 %v115
    %172 = vmatprep.subr.mxu0 0.0
    %173 = vmatpush1.msra.mxu0 %v114
    %174 = vmatprep.subr.mxu0 0.0
    %175 = vmatpush1.msra.mxu0 %v113
    %176 = vmatprep.subr.mxu0 0.0
    %177 = vmatpush1.msra.mxu0 %v112
    %178 = vmatprep.subr.mxu0 0.0
    %179 = vmatpush2.msra.mxu0 0.0
    %180 = vmatprep.subr.mxu0 0.0
    %181 = vmatpush2.msra.mxu0 0.0
    %182 = vmatprep.subr.mxu0 0.0
    %183 = vmatpush2.msra.mxu0 0.0
    %184 = vmatprep.subr.mxu0 0.0
    %185 = vmatpush2.msra.mxu0 0.0
    %186 = vmatprep.subr.mxu0 0.0
    %187 = vmatpush2.msra.mxu0 0.0
    %188 = vmatprep.subr.mxu0 0.0
    %189 = vmatpush2.msra.mxu0 0.0
    %190 = vmatprep.subr.mxu0 0.0
    %191 = vmatpush2.msra.mxu0 0.0
    %192 = vmatprep.subr.mxu0 0.0
    %193 = vmatpush2.msra.mxu0 0.0
    %194 = vmatprep.subr.mxu0 0.0
    %195 = vmatpush2.msra.mxu0 0.0
    %196 = vmatprep.subr.mxu0 0.0
    %197 = vmatpush2.msra.mxu0 0.0
    %198 = vmatprep.subr.mxu0 0.0
    %199 = vmatpush2.msra.mxu0 0.0
    %200 = vmatprep.subr.mxu0 0.0
    %201 = vmatpush2.msra.mxu0 0.0
    %202 = vmatprep.subr.mxu0 0.0
    %203 = vmatpush2.msra.mxu0 0.0
    %204 = vmatprep.subr.mxu0 0.0
    %205 = vmatpush2.msra.mxu0 0.0
    %206 = vmatprep.subr.mxu0 0.0
    %207 = vmatpush2.msra.mxu0 0.0
    %208 = vmatprep.subr.mxu0 0.0
    %209 = vmatpush2.msra.mxu0 0.0
    %210 = vmatprep.mubr.f32.mxu0 0.0
    %211 = vmatmul.mubr.f32.gmra.mxu0 %v141
    %v212 = vpop.f32.mrf.mxu0
    %v213 = vadd.f32 %v138, %v212
    %v214 = vpop.f32.mrf.mxu0
    %215 = vmatprep.mubr.f32.mxu0 0.0
    %216 = vmatmul.mubr.f32.gmra.mxu0 %v144
    %v217 = vpop.f32.mrf.mxu0
    %v218 = vadd.f32 %v138, %v217
    %v219 = vpop.f32.mrf.mxu0
    %220 = vdwg.mxu0
    %v221 = vlaneseq
    %v222 = vshrl.u32 %v221, 7
    %v223 = vsub.s32 0, %v222
    %v224 = vrot.slane %v132, %v223
    %225 = vmatprep.subr.mxu0 0.0
    %226 = vmatpush1.msra.mxu0 0.0
    %227 = vmatprep.subr.mxu0 0.0
    %228 = vmatpush1.msra.mxu0 0.0
    %229 = vmatprep.subr.mxu0 0.0
    %230 = vmatpush1.msra.mxu0 0.0
    %231 = vmatprep.subr.mxu0 0.0
    %232 = vmatpush1.msra.mxu0 0.0
    %233 = vmatprep.subr.mxu0 0.0
    %234 = vmatpush1.msra.mxu0 0.0
    %235 = vmatprep.subr.mxu0 0.0
    %236 = vmatpush1.msra.mxu0 0.0
    %237 = vmatprep.subr.mxu0 0.0
    %238 = vmatpush1.msra.mxu0 0.0
    %239 = vmatprep.subr.mxu0 0.0
    %240 = vmatpush1.msra.mxu0 0.0
    %241 = vmatprep.subr.mxu0 0.0
    %242 = vmatpush1.msra.mxu0 0.0
    %243 = vmatprep.subr.mxu0 0.0
    %244 = vmatpush1.msra.mxu0 0.0
    %245 = vmatprep.subr.mxu0 0.0
    %246 = vmatpush1.msra.mxu0 0.0
    %247 = vmatprep.subr.mxu0 0.0
    %248 = vmatpush1.msra.mxu0 0.0
    %249 = vmatprep.subr.mxu0 0.0
    %250 = vmatpush1.msra.mxu0 %v120
    %251 = vmatprep.subr.mxu0 0.0
    %252 = vmatpush1.msra.mxu0 %v119
    %253 = vmatprep.subr.mxu0 0.0
    %254 = vmatpush1.msra.mxu0 %v118
    %255 = vmatprep.subr.mxu0 0.0
    %256 = vmatpush1.msra.mxu0 %v117
    %257 = vmatprep.subr.mxu0 0.0
    %258 = vmatpush2.msra.mxu0 0.0
    %259 = vmatprep.subr.mxu0 0.0
    %260 = vmatpush2.msra.mxu0 0.0
    %261 = vmatprep.subr.mxu0 0.0
    %262 = vmatpush2.msra.mxu0 0.0
    %263 = vmatprep.subr.mxu0 0.0
    %264 = vmatpush2.msra.mxu0 0.0
    %265 = vmatprep.subr.mxu0 0.0
    %266 = vmatpush2.msra.mxu0 0.0
    %267 = vmatprep.subr.mxu0 0.0
    %268 = vmatpush2.msra.mxu0 0.0
    %269 = vmatprep.subr.mxu0 0.0
    %270 = vmatpush2.msra.mxu0 0.0
    %271 = vmatprep.subr.mxu0 0.0
    %272 = vmatpush2.msra.mxu0 0.0
    %273 = vmatprep.subr.mxu0 0.0
    %274 = vmatpush2.msra.mxu0 0.0
    %275 = vmatprep.subr.mxu0 0.0
    %276 = vmatpush2.msra.mxu0 0.0
    %277 = vmatprep.subr.mxu0 0.0
    %278 = vmatpush2.msra.mxu0 0.0
    %279 = vmatprep.subr.mxu0 0.0
    %280 = vmatpush2.msra.mxu0 0.0
    %281 = vmatprep.subr.mxu0 0.0
    %282 = vmatpush2.msra.mxu0 0.0
    %283 = vmatprep.subr.mxu0 0.0
    %284 = vmatpush2.msra.mxu0 0.0
    %285 = vmatprep.subr.mxu0 0.0
    %286 = vmatpush2.msra.mxu0 0.0
    %287 = vmatprep.subr.mxu0 0.0
    %288 = vmatpush2.msra.mxu0 0.0
    %289 = vmatprep.mubr.f32.mxu0 0.0
    %290 = vmatmul.mubr.f32.gmra.mxu0 %v141
    %v291 = vpop.f32.mrf.mxu0
    %v292 = vadd.f32 %v224, %v291
    %v293 = vpop.f32.mrf.mxu0
    %294 = vmatprep.mubr.f32.mxu0 0.0
    %295 = vmatmul.mubr.f32.gmra.mxu0 %v144
    %v296 = vpop.f32.mrf.mxu0
    %v297 = vadd.f32 %v224, %v296
    %v298 = vpop.f32.mrf.mxu0
    %299 = vdwg.mxu0
    %v300 = vlaneseq
    %v301 = vshrl.u32 %v300, 7
    %v302 = vsub.s32 0, %v301
    %v303 = vrot.slane %v133, %v302
    %304 = vmatprep.subr.mxu0 0.0
    %305 = vmatpush1.msra.mxu0 0.0
    %306 = vmatprep.subr.mxu0 0.0
    %307 = vmatpush1.msra.mxu0 0.0
    %308 = vmatprep.subr.mxu0 0.0
    %309 = vmatpush1.msra.mxu0 0.0
    %310 = vmatprep.subr.mxu0 0.0
    %311 = vmatpush1.msra.mxu0 0.0
    %312 = vmatprep.subr.mxu0 0.0
    %313 = vmatpush1.msra.mxu0 0.0
    %314 = vmatprep.subr.mxu0 0.0
    %315 = vmatpush1.msra.mxu0 0.0
    %316 = vmatprep.subr.mxu0 0.0
    %317 = vmatpush1.msra.mxu0 0.0
    %318 = vmatprep.subr.mxu0 0.0
    %319 = vmatpush1.msra.mxu0 0.0
    %320 = vmatprep.subr.mxu0 0.0
    %321 = vmatpush1.msra.mxu0 0.0
    %322 = vmatprep.subr.mxu0 0.0
    %323 = vmatpush1.msra.mxu0 0.0
    %324 = vmatprep.subr.mxu0 0.0
    %325 = vmatpush1.msra.mxu0 0.0
    %326 = vmatprep.subr.mxu0 0.0
    %327 = vmatpush1.msra.mxu0 0.0
    %328 = vmatprep.subr.mxu0 0.0
    %329 = vmatpush1.msra.mxu0 %v125
    %330 = vmatprep.subr.mxu0 0.0
    %331 = vmatpush1.msra.mxu0 %v124
    %332 = vmatprep.subr.mxu0 0.0
    %333 = vmatpush1.msra.mxu0 %v123
    %334 = vmatprep.subr.mxu0 0.0
    %335 = vmatpush1.msra.mxu0 %v122
    %336 = vmatprep.subr.mxu0 0.0
    %337 = vmatpush2.msra.mxu0 0.0
    %338 = vmatprep.subr.mxu0 0.0
    %339 = vmatpush2.msra.mxu0 0.0
    %340 = vmatprep.subr.mxu0 0.0
    %341 = vmatpush2.msra.mxu0 0.0
    %342 = vmatprep.subr.mxu0 0.0
    %343 = vmatpush2.msra.mxu0 0.0
    %344 = vmatprep.subr.mxu0 0.0
    %345 = vmatpush2.msra.mxu0 0.0
    %346 = vmatprep.subr.mxu0 0.0
    %347 = vmatpush2.msra.mxu0 0.0
    %348 = vmatprep.subr.mxu0 0.0
    %349 = vmatpush2.msra.mxu0 0.0
    %350 = vmatprep.subr.mxu0 0.0
    %351 = vmatpush2.msra.mxu0 0.0
    %352 = vmatprep.subr.mxu0 0.0
    %353 = vmatpush2.msra.mxu0 0.0
    %354 = vmatprep.subr.mxu0 0.0
    %355 = vmatpush2.msra.mxu0 0.0
    %356 = vmatprep.subr.mxu0 0.0
    %357 = vmatpush2.msra.mxu0 0.0
    %358 = vmatprep.subr.mxu0 0.0
    %359 = vmatpush2.msra.mxu0 0.0
    %360 = vmatprep.subr.mxu0 0.0
    %361 = vmatpush2.msra.mxu0 0.0
    %362 = vmatprep.subr.mxu0 0.0
    %363 = vmatpush2.msra.mxu0 0.0
    %364 = vmatprep.subr.mxu0 0.0
    %365 = vmatpush2.msra.mxu0 0.0
    %366 = vmatprep.subr.mxu0 0.0
    %367 = vmatpush2.msra.mxu0 0.0
    %368 = vmatprep.mubr.f32.mxu0 0.0
    %369 = vmatmul.mubr.f32.gmra.mxu0 %v141
    %v370 = vpop.f32.mrf.mxu0
    %v371 = vadd.f32 %v303, %v370
    %v372 = vpop.f32.mrf.mxu0
    %373 = vmatprep.mubr.f32.mxu0 0.0
    %374 = vmatmul.mubr.f32.gmra.mxu0 %v144
    %v375 = vpop.f32.mrf.mxu0
    %v376 = vadd.f32 %v303, %v375
    %v377 = vpop.f32.mrf.mxu0
    %378 = vdwg.mxu0
    %v379 = vmul.f32 %v213, %v85
    %v380 = vmul.f32 %v213, %v89
    %v381 = vmul.f32 %v213, %v93
    %v382 = vmul.f32 %v213, %v97
    %v383 = vmul.f32 %v218, %v85
    %v384 = vmul.f32 %v218, %v89
    %v385 = vmul.f32 %v218, %v93
    %v386 = vmul.f32 %v218, %v97
    %v388 = vsel %vm139, %v379, 0
    %v391 = vsel %vm139, %v380, 0
    %v394 = vsel %vm139, %v381, 0
    %v397 = vsel %vm139, %v382, 0
    %v400 = vsel %vm139, %v383, 0
    %v403 = vsel %vm139, %v384, 0
    %v406 = vsel %vm139, %v385, 0
    %v409 = vsel %vm139, %v386, 0
    %v412 = vsel %vm139, %v292, 0
    %v415 = vsel %vm139, %v297, 0
    %417 = vmatprep.subr.mxu0 0.0
    %418 = vmatpush1.xpose.msra.mxu0 0.0
    %419 = vmatprep.subr.mxu0 0.0
    %420 = vmatpush1.xpose.msra.mxu0 0.0
    %421 = vmatprep.subr.mxu0 0.0
    %422 = vmatpush1.xpose.msra.mxu0 0.0
    %423 = vmatprep.subr.mxu0 0.0
    %424 = vmatpush1.xpose.msra.mxu0 0.0
    %425 = vmatprep.subr.mxu0 0.0
    %426 = vmatpush1.xpose.msra.mxu0 0.0
    %427 = vmatprep.subr.mxu0 0.0
    %428 = vmatpush1.xpose.msra.mxu0 0.0
    %429 = vmatprep.subr.mxu0 0.0
    %430 = vmatpush1.xpose.msra.mxu0 0.0
    %431 = vmatprep.subr.mxu0 0.0
    %432 = vmatpush1.xpose.msra.mxu0 0.0
    %433 = vmatprep.subr.mxu0 0.0
    %434 = vmatpush1.xpose.msra.mxu0 0.0
    %435 = vmatprep.subr.mxu0 0.0
    %436 = vmatpush1.xpose.msra.mxu0 0.0
    %437 = vmatprep.subr.mxu0 0.0
    %438 = vmatpush1.xpose.msra.mxu0 0.0
    %439 = vmatprep.subr.mxu0 0.0
    %440 = vmatpush1.xpose.msra.mxu0 0.0
    %441 = vmatprep.subr.mxu0 0.0
    %442 = vmatpush1.xpose.msra.mxu0 0.0
    %443 = vmatprep.subr.mxu0 0.0
    %444 = vmatpush1.xpose.msra.mxu0 0.0
    %445 = vmatprep.subr.mxu0 0.0
    %446 = vmatpush1.xpose.msra.mxu0 %v415
    %447 = vmatprep.subr.mxu0 0.0
    %448 = vmatpush1.xpose.msra.mxu0 %v412
    %449 = vmatprep.subr.mxu0 0.0
    %450 = vmatpush2.xpose.msra.mxu0 0.0
    %451 = vmatprep.subr.mxu0 0.0
    %452 = vmatpush2.xpose.msra.mxu0 0.0
    %453 = vmatprep.subr.mxu0 0.0
    %454 = vmatpush2.xpose.msra.mxu0 0.0
    %455 = vmatprep.subr.mxu0 0.0
    %456 = vmatpush2.xpose.msra.mxu0 0.0
    %457 = vmatprep.subr.mxu0 0.0
    %458 = vmatpush2.xpose.msra.mxu0 0.0
    %459 = vmatprep.subr.mxu0 0.0
    %460 = vmatpush2.xpose.msra.mxu0 0.0
    %461 = vmatprep.subr.mxu0 0.0
    %462 = vmatpush2.xpose.msra.mxu0 0.0
    %463 = vmatprep.subr.mxu0 0.0
    %464 = vmatpush2.xpose.msra.mxu0 0.0
    %465 = vmatprep.subr.mxu0 0.0
    %466 = vmatpush2.xpose.msra.mxu0 0.0
    %467 = vmatprep.subr.mxu0 0.0
    %468 = vmatpush2.xpose.msra.mxu0 0.0
    %469 = vmatprep.subr.mxu0 0.0
    %470 = vmatpush2.xpose.msra.mxu0 0.0
    %471 = vmatprep.subr.mxu0 0.0
    %472 = vmatpush2.xpose.msra.mxu0 0.0
    %473 = vmatprep.subr.mxu0 0.0
    %474 = vmatpush2.xpose.msra.mxu0 0.0
    %475 = vmatprep.subr.mxu0 0.0
    %476 = vmatpush2.xpose.msra.mxu0 0.0
    %477 = vmatprep.subr.mxu0 0.0
    %478 = vmatpush2.xpose.msra.mxu0 0.0
    %479 = vmatprep.subr.mxu0 0.0
    %480 = vmatpush2.xpose.msra.mxu0 0.0
    %481 = vmatprep.mubr.f32.mxu0 0.0
    %482 = vmatmul.mubr.f32.gmra.mxu0 %v388
    %v483 = vpop.f32.mrf.mxu0
    %v484 = vadd.f32 %v102, %v483
    %v485 = vpop.f32.mrf.mxu0
    %486 = vmatprep.mubr.f32.mxu0 0.0
    %487 = vmatmul.mubr.f32.gmra.mxu0 %v391
    %v488 = vpop.f32.mrf.mxu0
    %v489 = vadd.f32 %v103, %v488
    %v490 = vpop.f32.mrf.mxu0
    %491 = vmatprep.mubr.f32.mxu0 0.0
    %492 = vmatmul.mubr.f32.gmra.mxu0 %v394
    %v493 = vpop.f32.mrf.mxu0
    %v494 = vadd.f32 %v104, %v493
    %v495 = vpop.f32.mrf.mxu0
    %496 = vmatprep.mubr.f32.mxu0 0.0
    %497 = vmatmul.mubr.f32.gmra.mxu0 %v397
    %v498 = vpop.f32.mrf.mxu0
    %v499 = vadd.f32 %v105, %v498
    %v500 = vpop.f32.mrf.mxu0
    %501 = vmatprep.mubr.f32.mxu0 0.0
    %502 = vmatmul.mubr.f32.gmra.mxu0 %v400
    %v503 = vpop.f32.mrf.mxu0
    %v504 = vadd.f32 %v106, %v503
    %v505 = vpop.f32.mrf.mxu0
    %506 = vmatprep.mubr.f32.mxu0 0.0
    %507 = vmatmul.mubr.f32.gmra.mxu0 %v403
    %v508 = vpop.f32.mrf.mxu0
    %v509 = vadd.f32 %v107, %v508
    %v510 = vpop.f32.mrf.mxu0
    %511 = vmatprep.mubr.f32.mxu0 0.0
    %512 = vmatmul.mubr.f32.gmra.mxu0 %v406
    %v513 = vpop.f32.mrf.mxu0
    %v514 = vadd.f32 %v108, %v513
    %v515 = vpop.f32.mrf.mxu0
    %516 = vmatprep.mubr.f32.mxu0 0.0
    %517 = vmatmul.mubr.f32.gmra.mxu0 %v409
    %v518 = vpop.f32.mrf.mxu0
    %v519 = vadd.f32 %v109, %v518
    %v520 = vpop.f32.mrf.mxu0
    %521 = vdwg.mxu0
    %vm522 = vcmask 130048
    %v523 = vsel %vm522, %v484, -inf
    %524 = vmax.xlane.f32.xlu0 %v523
    %v525 = vpop.xlane.xlu0 %524
    %v526 = vsel %vm522, %v489, -inf
    %527 = vmax.xlane.f32.xlu0 %v526
    %v528 = vpop.xlane.xlu0 %527
    %v529 = vsel %vm522, %v494, -inf
    %530 = vmax.xlane.f32.xlu0 %v529
    %v531 = vpop.xlane.xlu0 %530
    %v532 = vsel %vm522, %v499, -inf
    %533 = vmax.xlane.f32.xlu0 %v532
    %v534 = vpop.xlane.xlu0 %533
    %v535 = vsel %vm522, %v504, -inf
    %536 = vmax.xlane.f32.xlu0 %v535
    %v537 = vpop.xlane.xlu0 %536
    %v538 = vsel %vm522, %v509, -inf
    %539 = vmax.xlane.f32.xlu0 %v538
    %v540 = vpop.xlane.xlu0 %539
    %v541 = vsel %vm522, %v514, -inf
    %542 = vmax.xlane.f32.xlu0 %v541
    %v543 = vpop.xlane.xlu0 %542
    %v544 = vsel %vm522, %v519, -inf
    %545 = vmax.xlane.f32.xlu0 %v544
    %v546 = vpop.xlane.xlu0 %545
    %v547 = vsub.f32 %v484, %v525
    %v548 = vsub.f32 %v489, %v528
    %v549 = vsub.f32 %v494, %v531
    %v550 = vsub.f32 %v499, %v534
    %v551 = vsub.f32 %v504, %v537
    %v552 = vsub.f32 %v509, %v540
    %v553 = vsub.f32 %v514, %v543
    %v554 = vsub.f32 %v519, %v546
    %v555 = vmul.f32 %v547, 1.442695
    %v556 = vpow.pop %v555
    %v557 = vmul.f32 %v548, 1.442695
    %v558 = vpow.pop %v557
    %v559 = vmul.f32 %v549, 1.442695
    %v560 = vpow.pop %v559
    %v561 = vmul.f32 %v550, 1.442695
    %v562 = vpow.pop %v561
    %v563 = vmul.f32 %v551, 1.442695
    %v564 = vpow.pop %v563
    %v565 = vmul.f32 %v552, 1.442695
    %v566 = vpow.pop %v565
    %v567 = vmul.f32 %v553, 1.442695
    %v568 = vpow.pop %v567
    %v569 = vmul.f32 %v554, 1.442695
    %v570 = vpow.pop %v569
    %v571 = vsel %vm522, %v556, 0.0
    %572 = vadd.xlane.f32.xlu0 %v571
    %v573 = vpop.xlane.xlu0 %572
    %v574 = vsel %vm522, %v558, 0.0
    %575 = vadd.xlane.f32.xlu0 %v574
    %v576 = vpop.xlane.xlu0 %575
    %v577 = vsel %vm522, %v560, 0.0
    %578 = vadd.xlane.f32.xlu0 %v577
    %v579 = vpop.xlane.xlu0 %578
    %v580 = vsel %vm522, %v562, 0.0
    %581 = vadd.xlane.f32.xlu0 %v580
    %v582 = vpop.xlane.xlu0 %581
    %v583 = vsel %vm522, %v564, 0.0
    %584 = vadd.xlane.f32.xlu0 %v583
    %v585 = vpop.xlane.xlu0 %584
    %v586 = vsel %vm522, %v566, 0.0
    %587 = vadd.xlane.f32.xlu0 %v586
    %v588 = vpop.xlane.xlu0 %587
    %v589 = vsel %vm522, %v568, 0.0
    %590 = vadd.xlane.f32.xlu0 %v589
    %v591 = vpop.xlane.xlu0 %590
    %v592 = vsel %vm522, %v570, 0.0
    %593 = vadd.xlane.f32.xlu0 %v592
    %v594 = vpop.xlane.xlu0 %593
    %v595 = vrcp.pop %v573
    %v596 = vrcp.pop %v576
    %v597 = vrcp.pop %v579
    %v598 = vrcp.pop %v582
    %v599 = vrcp.pop %v585
    %v600 = vrcp.pop %v588
    %v601 = vrcp.pop %v591
    %v602 = vrcp.pop %v594
    %v603 = vmul.f32 %v573, %v595
    %v604 = vmul.f32 %v576, %v596
    %v605 = vmul.f32 %v579, %v597
    %v606 = vmul.f32 %v582, %v598
    %v607 = vmul.f32 %v585, %v599
    %v608 = vmul.f32 %v588, %v600
    %v609 = vmul.f32 %v591, %v601
    %v610 = vmul.f32 %v594, %v602
    %v611 = vsub.f32 2.0, %v603
    %v612 = vsub.f32 2.0, %v604
    %v613 = vsub.f32 2.0, %v605
    %v614 = vsub.f32 2.0, %v606
    %v615 = vsub.f32 2.0, %v607
    %v616 = vsub.f32 2.0, %v608
    %v617 = vsub.f32 2.0, %v609
    %v618 = vsub.f32 2.0, %v610
    %v619 = vmul.f32 %v595, %v611
    %v620 = vmul.f32 %v596, %v612
    %v621 = vmul.f32 %v597, %v613
    %v622 = vmul.f32 %v598, %v614
    %v623 = vmul.f32 %v599, %v615
    %v624 = vmul.f32 %v600, %v616
    %v625 = vmul.f32 %v601, %v617
    %v626 = vmul.f32 %v602, %v618
    %v627 = vmul.f32 %v556, %v619
    %v628 = vmul.f32 %v558, %v620
    %v629 = vmul.f32 %v560, %v621
    %v630 = vmul.f32 %v562, %v622
    %v631 = vmul.f32 %v564, %v623
    %v632 = vmul.f32 %v566, %v624
    %v633 = vmul.f32 %v568, %v625
    %v634 = vmul.f32 %v570, %v626
    %v636 = vsel %vm522, %v627, 0
    %v639 = vsel %vm522, %v628, 0
    %v642 = vsel %vm522, %v629, 0
    %v645 = vsel %vm522, %v630, 0
    %v648 = vsel %vm522, %v631, 0
    %v651 = vsel %vm522, %v632, 0
    %v654 = vsel %vm522, %v633, 0
    %v657 = vsel %vm522, %v634, 0
    %659 = vmatprep.subr.mxu0 0.0
    %660 = vmatpush1.msra.mxu0 0.0
    %661 = vmatprep.subr.mxu0 0.0
    %662 = vmatpush1.msra.mxu0 0.0
    %663 = vmatprep.subr.mxu0 0.0
    %664 = vmatpush1.msra.mxu0 0.0
    %665 = vmatprep.subr.mxu0 0.0
    %666 = vmatpush1.msra.mxu0 0.0
    %667 = vmatprep.subr.mxu0 0.0
    %668 = vmatpush1.msra.mxu0 0.0
    %669 = vmatprep.subr.mxu0 0.0
    %670 = vmatpush1.msra.mxu0 0.0
    %671 = vmatprep.subr.mxu0 0.0
    %672 = vmatpush1.msra.mxu0 0.0
    %673 = vmatprep.subr.mxu0 0.0
    %674 = vmatpush1.msra.mxu0 0.0
    %675 = vmatprep.subr.mxu0 0.0
    %676 = vmatpush1.msra.mxu0 0.0
    %677 = vmatprep.subr.mxu0 0.0
    %678 = vmatpush1.msra.mxu0 0.0
    %679 = vmatprep.subr.mxu0 0.0
    %680 = vmatpush1.msra.mxu0 0.0
    %681 = vmatprep.subr.mxu0 0.0
    %682 = vmatpush1.msra.mxu0 0.0
    %683 = vmatprep.subr.mxu0 0.0
    %684 = vmatpush1.msra.mxu0 0.0
    %685 = vmatprep.subr.mxu0 0.0
    %686 = vmatpush1.msra.mxu0 0.0
    %687 = vmatprep.subr.mxu0 0.0
    %688 = vmatpush1.msra.mxu0 %v376
    %689 = vmatprep.subr.mxu0 0.0
    %690 = vmatpush1.msra.mxu0 %v371
    %691 = vmatprep.subr.mxu0 0.0
    %692 = vmatpush2.msra.mxu0 0.0
    %693 = vmatprep.subr.mxu0 0.0
    %694 = vmatpush2.msra.mxu0 0.0
    %695 = vmatprep.subr.mxu0 0.0
    %696 = vmatpush2.msra.mxu0 0.0
    %697 = vmatprep.subr.mxu0 0.0
    %698 = vmatpush2.msra.mxu0 0.0
    %699 = vmatprep.subr.mxu0 0.0
    %700 = vmatpush2.msra.mxu0 0.0
    %701 = vmatprep.subr.mxu0 0.0
    %702 = vmatpush2.msra.mxu0 0.0
    %703 = vmatprep.subr.mxu0 0.0
    %704 = vmatpush2.msra.mxu0 0.0
    %705 = vmatprep.subr.mxu0 0.0
    %706 = vmatpush2.msra.mxu0 0.0
    %707 = vmatprep.subr.mxu0 0.0
    %708 = vmatpush2.msra.mxu0 0.0
    %709 = vmatprep.subr.mxu0 0.0
    %710 = vmatpush2.msra.mxu0 0.0
    %711 = vmatprep.subr.mxu0 0.0
    %712 = vmatpush2.msra.mxu0 0.0
    %713 = vmatprep.subr.mxu0 0.0
    %714 = vmatpush2.msra.mxu0 0.0
    %715 = vmatprep.subr.mxu0 0.0
    %716 = vmatpush2.msra.mxu0 0.0
    %717 = vmatprep.subr.mxu0 0.0
    %718 = vmatpush2.msra.mxu0 0.0
    %719 = vmatprep.subr.mxu0 0.0
    %720 = vmatpush2.msra.mxu0 0.0
    %721 = vmatprep.subr.mxu0 0.0
    %722 = vmatpush2.msra.mxu0 0.0
    %723 = vmatprep.mubr.f32.mxu0 0.0
    %724 = vmatmul.mubr.f32.gmra.mxu0 %v636
    %v725 = vpop.f32.mrf.mxu0
    %v726 = vadd.f32 0.0, %v725
    %v727 = vpop.f32.mrf.mxu0
    %728 = vmatprep.mubr.f32.mxu0 0.0
    %729 = vmatmul.mubr.f32.gmra.mxu0 %v639
    %v730 = vpop.f32.mrf.mxu0
    %v731 = vadd.f32 0.0, %v730
    %v732 = vpop.f32.mrf.mxu0
    %733 = vmatprep.mubr.f32.mxu0 0.0
    %734 = vmatmul.mubr.f32.gmra.mxu0 %v642
    %v735 = vpop.f32.mrf.mxu0
    %v736 = vadd.f32 0.0, %v735
    %v737 = vpop.f32.mrf.mxu0
    %738 = vmatprep.mubr.f32.mxu0 0.0
    %739 = vmatmul.mubr.f32.gmra.mxu0 %v645
    %v740 = vpop.f32.mrf.mxu0
    %v741 = vadd.f32 0.0, %v740
    %v742 = vpop.f32.mrf.mxu0
    %743 = vmatprep.mubr.f32.mxu0 0.0
    %744 = vmatmul.mubr.f32.gmra.mxu0 %v648
    %v745 = vpop.f32.mrf.mxu0
    %v746 = vadd.f32 0.0, %v745
    %v747 = vpop.f32.mrf.mxu0
    %748 = vmatprep.mubr.f32.mxu0 0.0
    %749 = vmatmul.mubr.f32.gmra.mxu0 %v651
    %v750 = vpop.f32.mrf.mxu0
    %v751 = vadd.f32 0.0, %v750
    %v752 = vpop.f32.mrf.mxu0
    %753 = vmatprep.mubr.f32.mxu0 0.0
    %754 = vmatmul.mubr.f32.gmra.mxu0 %v654
    %v755 = vpop.f32.mrf.mxu0
    %v756 = vadd.f32 0.0, %v755
    %v757 = vpop.f32.mrf.mxu0
    %758 = vmatprep.mubr.f32.mxu0 0.0
    %759 = vmatmul.mubr.f32.gmra.mxu0 %v657
    %v760 = vpop.f32.mrf.mxu0
    %v761 = vadd.f32 0.0, %v760
    %v762 = vpop.f32.mrf.mxu0
    %763 = vdwg.mxu0
    %v764 = vmul.f32 %v726, %v85
    %v765 = vmul.f32 %v731, %v89
    %v766 = vmul.f32 %v736, %v93
    %v767 = vmul.f32 %v741, %v97
    %v768 = vmul.f32 %v746, %v85
    %v769 = vmul.f32 %v751, %v89
    %v770 = vmul.f32 %v756, %v93
    %v771 = vmul.f32 %v761, %v97
    %v772 = vsel %vm139, %v764, 0.0
    %v773 = vsel %vm139, %v765, 0.0
    %v774 = vadd.f32 %v772, %v773
    %v775 = vsel %vm139, %v766, 0.0
    %v776 = vadd.f32 %v774, %v775
    %v777 = vsel %vm139, %v767, 0.0
    %v778 = vadd.f32 %v776, %v777
    %v779 = vsel %vm139, %v768, 0.0
    %v780 = vsel %vm139, %v769, 0.0
    %v781 = vadd.f32 %v779, %v780
    %v782 = vsel %vm139, %v770, 0.0
    %v783 = vadd.f32 %v781, %v782
    %v784 = vsel %vm139, %v771, 0.0
    %v785 = vadd.f32 %v783, %v784
    %v786 = vlaneseq
    %v787 = vshrl.u32 %v786, 7
    %v788 = vsub.s32 0, %v787
    %v789 = vrot.slane %v134, %v788
    %v791 = vsel %vm139, %v778, 0
    %v794 = vsel %vm139, %v785, 0
    %796 = vmatprep.subr.mxu0 0.0
    %797 = vmatpush1.msra.mxu0 0.0
    %798 = vmatprep.subr.mxu0 0.0
    %799 = vmatpush1.msra.mxu0 0.0
    %800 = vmatprep.subr.mxu0 0.0
    %801 = vmatpush1.msra.mxu0 0.0
    %802 = vmatprep.subr.mxu0 0.0
    %803 = vmatpush1.msra.mxu0 0.0
    %804 = vmatprep.subr.mxu0 0.0
    %805 = vmatpush1.msra.mxu0 0.0
    %806 = vmatprep.subr.mxu0 0.0
    %807 = vmatpush1.msra.mxu0 0.0
    %808 = vmatprep.subr.mxu0 0.0
    %809 = vmatpush1.msra.mxu0 0.0
    %810 = vmatprep.subr.mxu0 0.0
    %811 = vmatpush1.msra.mxu0 0.0
    %812 = vmatprep.subr.mxu0 0.0
    %813 = vmatpush1.msra.mxu0 0.0
    %814 = vmatprep.subr.mxu0 0.0
    %815 = vmatpush1.msra.mxu0 0.0
    %816 = vmatprep.subr.mxu0 0.0
    %817 = vmatpush1.msra.mxu0 0.0
    %818 = vmatprep.subr.mxu0 0.0
    %819 = vmatpush1.msra.mxu0 0.0
    %820 = vmatprep.subr.mxu0 0.0
    %821 = vmatpush1.msra.mxu0 %v130
    %822 = vmatprep.subr.mxu0 0.0
    %823 = vmatpush1.msra.mxu0 %v129
    %824 = vmatprep.subr.mxu0 0.0
    %825 = vmatpush1.msra.mxu0 %v128
    %826 = vmatprep.subr.mxu0 0.0
    %827 = vmatpush1.msra.mxu0 %v127
    %828 = vmatprep.subr.mxu0 0.0
    %829 = vmatpush2.msra.mxu0 0.0
    %830 = vmatprep.subr.mxu0 0.0
    %831 = vmatpush2.msra.mxu0 0.0
    %832 = vmatprep.subr.mxu0 0.0
    %833 = vmatpush2.msra.mxu0 0.0
    %834 = vmatprep.subr.mxu0 0.0
    %835 = vmatpush2.msra.mxu0 0.0
    %836 = vmatprep.subr.mxu0 0.0
    %837 = vmatpush2.msra.mxu0 0.0
    %838 = vmatprep.subr.mxu0 0.0
    %839 = vmatpush2.msra.mxu0 0.0
    %840 = vmatprep.subr.mxu0 0.0
    %841 = vmatpush2.msra.mxu0 0.0
    %842 = vmatprep.subr.mxu0 0.0
    %843 = vmatpush2.msra.mxu0 0.0
    %844 = vmatprep.subr.mxu0 0.0
    %845 = vmatpush2.msra.mxu0 0.0
    %846 = vmatprep.subr.mxu0 0.0
    %847 = vmatpush2.msra.mxu0 0.0
    %848 = vmatprep.subr.mxu0 0.0
    %849 = vmatpush2.msra.mxu0 0.0
    %850 = vmatprep.subr.mxu0 0.0
    %851 = vmatpush2.msra.mxu0 0.0
    %852 = vmatprep.subr.mxu0 0.0
    %853 = vmatpush2.msra.mxu0 0.0
    %854 = vmatprep.subr.mxu0 0.0
    %855 = vmatpush2.msra.mxu0 0.0
    %856 = vmatprep.subr.mxu0 0.0
    %857 = vmatpush2.msra.mxu0 0.0
    %858 = vmatprep.subr.mxu0 0.0
    %859 = vmatpush2.msra.mxu0 0.0
    %860 = vmatprep.mubr.f32.mxu0 0.0
    %861 = vmatmul.mubr.f32.gmra.mxu0 %v791
    %v862 = vpop.f32.mrf.mxu0
    %v863 = vadd.f32 %v789, %v862
    %v864 = vpop.f32.mrf.mxu0
    %865 = vmatprep.mubr.f32.mxu0 0.0
    %866 = vmatmul.mubr.f32.gmra.mxu0 %v794
    %v867 = vpop.f32.mrf.mxu0
    %v868 = vadd.f32 %v789, %v867
    %v869 = vpop.f32.mrf.mxu0
    %870 = vdwg.mxu0
    %s871 = scalar_lea.vmem [#allocation5], 128
    %v872 = vld [vmem:[%s871] sm:$0xff]
    %v873 = vld [vmem:[%s871 + $0x8] sm:$0xff]
    %v874 = vld [vmem:[%s871 + $0x10] sm:$0xff]
    %v875 = vld [vmem:[%s871 + $0x18] sm:$0xff]
    %s876 = scalar_lea.vmem [#allocation5], 160
    %v877 = vld [vmem:[%s876] sm:$0xff]
    %v878 = vld [vmem:[%s876 + $0x8] sm:$0xff]
    %v879 = vld [vmem:[%s876 + $0x10] sm:$0xff]
    %v880 = vld [vmem:[%s876 + $0x18] sm:$0xff]
    %s881 = scalar_lea.vmem [#allocation5], 192
    %v882 = vld [vmem:[%s881] sm:$0xff]
    %v883 = vld [vmem:[%s881 + $0x8] sm:$0xff]
    %v884 = vld [vmem:[%s881 + $0x10] sm:$0xff]
    %v885 = vld [vmem:[%s881 + $0x18] sm:$0xff]
    %s886 = scalar_lea.vmem [#allocation5], 224
    %v887 = vld [vmem:[%s886] sm:$0xff]
    %v888 = vld [vmem:[%s886 + $0x8] sm:$0xff]
    %v889 = vld [vmem:[%s886 + $0x10] sm:$0xff]
    %v890 = vld [vmem:[%s886 + $0x18] sm:$0xff]
    %v891 = vld [vmem:[#allocation7 + $0x4] sm:$0x1]
    %v892 = vld [vmem:[#allocation7 + $0x5] sm:$0x1]
    %v893 = vld [vmem:[#allocation7 + $0x6] sm:$0x1]
    %v894 = vld [vmem:[#allocation7 + $0x7] sm:$0x1]
    %v895 = vlaneseq
    %v896 = vshrl.u32 %v895, 7
    %v897 = vsub.s32 0, %v896
    %v898 = vrot.slane %v891, %v897
    %v900 = vsel %vm139, %v863, 0
    %v903 = vsel %vm139, %v868, 0
    %905 = vmatprep.subr.mxu0 0.0
    %906 = vmatpush1.msra.mxu0 0.0
    %907 = vmatprep.subr.mxu0 0.0
    %908 = vmatpush1.msra.mxu0 0.0
    %909 = vmatprep.subr.mxu0 0.0
    %910 = vmatpush1.msra.mxu0 0.0
    %911 = vmatprep.subr.mxu0 0.0
    %912 = vmatpush1.msra.mxu0 0.0
    %913 = vmatprep.subr.mxu0 0.0
    %914 = vmatpush1.msra.mxu0 0.0
    %915 = vmatprep.subr.mxu0 0.0
    %916 = vmatpush1.msra.mxu0 0.0
    %917 = vmatprep.subr.mxu0 0.0
    %918 = vmatpush1.msra.mxu0 0.0
    %919 = vmatprep.subr.mxu0 0.0
    %920 = vmatpush1.msra.mxu0 0.0
    %921 = vmatprep.subr.mxu0 0.0
    %922 = vmatpush1.msra.mxu0 0.0
    %923 = vmatprep.subr.mxu0 0.0
    %924 = vmatpush1.msra.mxu0 0.0
    %925 = vmatprep.subr.mxu0 0.0
    %926 = vmatpush1.msra.mxu0 0.0
    %927 = vmatprep.subr.mxu0 0.0
    %928 = vmatpush1.msra.mxu0 0.0
    %929 = vmatprep.subr.mxu0 0.0
    %930 = vmatpush1.msra.mxu0 %v875
    %931 = vmatprep.subr.mxu0 0.0
    %932 = vmatpush1.msra.mxu0 %v874
    %933 = vmatprep.subr.mxu0 0.0
    %934 = vmatpush1.msra.mxu0 %v873
    %935 = vmatprep.subr.mxu0 0.0
    %936 = vmatpush1.msra.mxu0 %v872
    %937 = vmatprep.subr.mxu0 0.0
    %938 = vmatpush2.msra.mxu0 0.0
    %939 = vmatprep.subr.mxu0 0.0
    %940 = vmatpush2.msra.mxu0 0.0
    %941 = vmatprep.subr.mxu0 0.0
    %942 = vmatpush2.msra.mxu0 0.0
    %943 = vmatprep.subr.mxu0 0.0
    %944 = vmatpush2.msra.mxu0 0.0
    %945 = vmatprep.subr.mxu0 0.0
    %946 = vmatpush2.msra.mxu0 0.0
    %947 = vmatprep.subr.mxu0 0.0
    %948 = vmatpush2.msra.mxu0 0.0
    %949 = vmatprep.subr.mxu0 0.0
    %950 = vmatpush2.msra.mxu0 0.0
    %951 = vmatprep.subr.mxu0 0.0
    %952 = vmatpush2.msra.mxu0 0.0
    %953 = vmatprep.subr.mxu0 0.0
    %954 = vmatpush2.msra.mxu0 0.0
    %955 = vmatprep.subr.mxu0 0.0
    %956 = vmatpush2.msra.mxu0 0.0
    %957 = vmatprep.subr.mxu0 0.0
    %958 = vmatpush2.msra.mxu0 0.0
    %959 = vmatprep.subr.mxu0 0.0
    %960 = vmatpush2.msra.mxu0 0.0
    %961 = vmatprep.subr.mxu0 0.0
    %962 = vmatpush2.msra.mxu0 0.0
    %963 = vmatprep.subr.mxu0 0.0
    %964 = vmatpush2.msra.mxu0 0.0
    %965 = vmatprep.subr.mxu0 0.0
    %966 = vmatpush2.msra.mxu0 0.0
    %967 = vmatprep.subr.mxu0 0.0
    %968 = vmatpush2.msra.mxu0 0.0
    %969 = vmatprep.mubr.f32.mxu0 0.0
    %970 = vmatmul.mubr.f32.gmra.mxu0 %v900
    %v971 = vpop.f32.mrf.mxu0
    %v972 = vadd.f32 %v898, %v971
    %v973 = vpop.f32.mrf.mxu0
    %974 = vmatprep.mubr.f32.mxu0 0.0
    %975 = vmatmul.mubr.f32.gmra.mxu0 %v903
    %v976 = vpop.f32.mrf.mxu0
    %v977 = vadd.f32 %v898, %v976
    %v978 = vpop.f32.mrf.mxu0
    %979 = vdwg.mxu0
    %v980 = vlaneseq
    %v981 = vshrl.u32 %v980, 7
    %v982 = vsub.s32 0, %v981
    %v983 = vrot.slane %v892, %v982
    %984 = vmatprep.subr.mxu0 0.0
    %985 = vmatpush1.msra.mxu0 0.0
    %986 = vmatprep.subr.mxu0 0.0
    %987 = vmatpush1.msra.mxu0 0.0
    %988 = vmatprep.subr.mxu0 0.0
    %989 = vmatpush1.msra.mxu0 0.0
    %990 = vmatprep.subr.mxu0 0.0
    %991 = vmatpush1.msra.mxu0 0.0
    %992 = vmatprep.subr.mxu0 0.0
    %993 = vmatpush1.msra.mxu0 0.0
    %994 = vmatprep.subr.mxu0 0.0
    %995 = vmatpush1.msra.mxu0 0.0
    %996 = vmatprep.subr.mxu0 0.0
    %997 = vmatpush1.msra.mxu0 0.0
    %998 = vmatprep.subr.mxu0 0.0
    %999 = vmatpush1.msra.mxu0 0.0
    %1000 = vmatprep.subr.mxu0 0.0
    %1001 = vmatpush1.msra.mxu0 0.0
    %1002 = vmatprep.subr.mxu0 0.0
    %1003 = vmatpush1.msra.mxu0 0.0
    %1004 = vmatprep.subr.mxu0 0.0
    %1005 = vmatpush1.msra.mxu0 0.0
    %1006 = vmatprep.subr.mxu0 0.0
    %1007 = vmatpush1.msra.mxu0 0.0
    %1008 = vmatprep.subr.mxu0 0.0
    %1009 = vmatpush1.msra.mxu0 %v880
    %1010 = vmatprep.subr.mxu0 0.0
    %1011 = vmatpush1.msra.mxu0 %v879
    %1012 = vmatprep.subr.mxu0 0.0
    %1013 = vmatpush1.msra.mxu0 %v878
    %1014 = vmatprep.subr.mxu0 0.0
    %1015 = vmatpush1.msra.mxu0 %v877
    %1016 = vmatprep.subr.mxu0 0.0
    %1017 = vmatpush2.msra.mxu0 0.0
    %1018 = vmatprep.subr.mxu0 0.0
    %1019 = vmatpush2.msra.mxu0 0.0
    %1020 = vmatprep.subr.mxu0 0.0
    %1021 = vmatpush2.msra.mxu0 0.0
    %1022 = vmatprep.subr.mxu0 0.0
    %1023 = vmatpush2.msra.mxu0 0.0
    %1024 = vmatprep.subr.mxu0 0.0
    %1025 = vmatpush2.msra.mxu0 0.0
    %1026 = vmatprep.subr.mxu0 0.0
    %1027 = vmatpush2.msra.mxu0 0.0
    %1028 = vmatprep.subr.mxu0 0.0
    %1029 = vmatpush2.msra.mxu0 0.0
    %1030 = vmatprep.subr.mxu0 0.0
    %1031 = vmatpush2.msra.mxu0 0.0
    %1032 = vmatprep.subr.mxu0 0.0
    %1033 = vmatpush2.msra.mxu0 0.0
    %1034 = vmatprep.subr.mxu0 0.0
    %1035 = vmatpush2.msra.mxu0 0.0
    %1036 = vmatprep.subr.mxu0 0.0
    %1037 = vmatpush2.msra.mxu0 0.0
    %1038 = vmatprep.subr.mxu0 0.0
    %1039 = vmatpush2.msra.mxu0 0.0
    %1040 = vmatprep.subr.mxu0 0.0
    %1041 = vmatpush2.msra.mxu0 0.0
    %1042 = vmatprep.subr.mxu0 0.0
    %1043 = vmatpush2.msra.mxu0 0.0
    %1044 = vmatprep.subr.mxu0 0.0
    %1045 = vmatpush2.msra.mxu0 0.0
    %1046 = vmatprep.subr.mxu0 0.0
    %1047 = vmatpush2.msra.mxu0 0.0
    %1048 = vmatprep.mubr.f32.mxu0 0.0
    %1049 = vmatmul.mubr.f32.gmra.mxu0 %v900
    %v1050 = vpop.f32.mrf.mxu0
    %v1051 = vadd.f32 %v983, %v1050
    %v1052 = vpop.f32.mrf.mxu0
    %1053 = vmatprep.mubr.f32.mxu0 0.0
    %1054 = vmatmul.mubr.f32.gmra.mxu0 %v903
    %v1055 = vpop.f32.mrf.mxu0
    %v1056 = vadd.f32 %v983, %v1055
    %v1057 = vpop.f32.mrf.mxu0
    %1058 = vdwg.mxu0
    %v1059 = vlaneseq
    %v1060 = vshrl.u32 %v1059, 7
    %v1061 = vsub.s32 0, %v1060
    %v1062 = vrot.slane %v893, %v1061
    %1063 = vmatprep.subr.mxu0 0.0
    %1064 = vmatpush1.msra.mxu0 0.0
    %1065 = vmatprep.subr.mxu0 0.0
    %1066 = vmatpush1.msra.mxu0 0.0
    %1067 = vmatprep.subr.mxu0 0.0
    %1068 = vmatpush1.msra.mxu0 0.0
    %1069 = vmatprep.subr.mxu0 0.0
    %1070 = vmatpush1.msra.mxu0 0.0
    %1071 = vmatprep.subr.mxu0 0.0
    %1072 = vmatpush1.msra.mxu0 0.0
    %1073 = vmatprep.subr.mxu0 0.0
    %1074 = vmatpush1.msra.mxu0 0.0
    %1075 = vmatprep.subr.mxu0 0.0
    %1076 = vmatpush1.msra.mxu0 0.0
    %1077 = vmatprep.subr.mxu0 0.0
    %1078 = vmatpush1.msra.mxu0 0.0
    %1079 = vmatprep.subr.mxu0 0.0
    %1080 = vmatpush1.msra.mxu0 0.0
    %1081 = vmatprep.subr.mxu0 0.0
    %1082 = vmatpush1.msra.mxu0 0.0
    %1083 = vmatprep.subr.mxu0 0.0
    %1084 = vmatpush1.msra.mxu0 0.0
    %1085 = vmatprep.subr.mxu0 0.0
    %1086 = vmatpush1.msra.mxu0 0.0
    %1087 = vmatprep.subr.mxu0 0.0
    %1088 = vmatpush1.msra.mxu0 %v885
    %1089 = vmatprep.subr.mxu0 0.0
    %1090 = vmatpush1.msra.mxu0 %v884
    %1091 = vmatprep.subr.mxu0 0.0
    %1092 = vmatpush1.msra.mxu0 %v883
    %1093 = vmatprep.subr.mxu0 0.0
    %1094 = vmatpush1.msra.mxu0 %v882
    %1095 = vmatprep.subr.mxu0 0.0
    %1096 = vmatpush2.msra.mxu0 0.0
    %1097 = vmatprep.subr.mxu0 0.0
    %1098 = vmatpush2.msra.mxu0 0.0
    %1099 = vmatprep.subr.mxu0 0.0
    %1100 = vmatpush2.msra.mxu0 0.0
    %1101 = vmatprep.subr.mxu0 0.0
    %1102 = vmatpush2.msra.mxu0 0.0
    %1103 = vmatprep.subr.mxu0 0.0
    %1104 = vmatpush2.msra.mxu0 0.0
    %1105 = vmatprep.subr.mxu0 0.0
    %1106 = vmatpush2.msra.mxu0 0.0
    %1107 = vmatprep.subr.mxu0 0.0
    %1108 = vmatpush2.msra.mxu0 0.0
    %1109 = vmatprep.subr.mxu0 0.0
    %1110 = vmatpush2.msra.mxu0 0.0
    %1111 = vmatprep.subr.mxu0 0.0
    %1112 = vmatpush2.msra.mxu0 0.0
    %1113 = vmatprep.subr.mxu0 0.0
    %1114 = vmatpush2.msra.mxu0 0.0
    %1115 = vmatprep.subr.mxu0 0.0
    %1116 = vmatpush2.msra.mxu0 0.0
    %1117 = vmatprep.subr.mxu0 0.0
    %1118 = vmatpush2.msra.mxu0 0.0
    %1119 = vmatprep.subr.mxu0 0.0
    %1120 = vmatpush2.msra.mxu0 0.0
    %1121 = vmatprep.subr.mxu0 0.0
    %1122 = vmatpush2.msra.mxu0 0.0
    %1123 = vmatprep.subr.mxu0 0.0
    %1124 = vmatpush2.msra.mxu0 0.0
    %1125 = vmatprep.subr.mxu0 0.0
    %1126 = vmatpush2.msra.mxu0 0.0
    %1127 = vmatprep.mubr.f32.mxu0 0.0
    %1128 = vmatmul.mubr.f32.gmra.mxu0 %v900
    %v1129 = vpop.f32.mrf.mxu0
    %v1130 = vadd.f32 %v1062, %v1129
    %v1131 = vpop.f32.mrf.mxu0
    %1132 = vmatprep.mubr.f32.mxu0 0.0
    %1133 = vmatmul.mubr.f32.gmra.mxu0 %v903
    %v1134 = vpop.f32.mrf.mxu0
    %v1135 = vadd.f32 %v1062, %v1134
    %v1136 = vpop.f32.mrf.mxu0
    %1137 = vdwg.mxu0
    %v1138 = vmul.f32 %v972, %v85
    %v1139 = vmul.f32 %v972, %v89
    %v1140 = vmul.f32 %v972, %v93
    %v1141 = vmul.f32 %v972, %v97
    %v1142 = vmul.f32 %v977, %v85
    %v1143 = vmul.f32 %v977, %v89
    %v1144 = vmul.f32 %v977, %v93
    %v1145 = vmul.f32 %v977, %v97
    %v1147 = vsel %vm139, %v1138, 0
    %v1150 = vsel %vm139, %v1139, 0
    %v1153 = vsel %vm139, %v1140, 0
    %v1156 = vsel %vm139, %v1141, 0
    %v1159 = vsel %vm139, %v1142, 0
    %v1162 = vsel %vm139, %v1143, 0
    %v1165 = vsel %vm139, %v1144, 0
    %v1168 = vsel %vm139, %v1145, 0
    %v1171 = vsel %vm139, %v1051, 0
    %v1174 = vsel %vm139, %v1056, 0
    %1176 = vmatprep.subr.mxu0 0.0
    %1177 = vmatpush1.xpose.msra.mxu0 0.0
    %1178 = vmatprep.subr.mxu0 0.0
    %1179 = vmatpush1.xpose.msra.mxu0 0.0
    %1180 = vmatprep.subr.mxu0 0.0
    %1181 = vmatpush1.xpose.msra.mxu0 0.0
    %1182 = vmatprep.subr.mxu0 0.0
    %1183 = vmatpush1.xpose.msra.mxu0 0.0
    %1184 = vmatprep.subr.mxu0 0.0
    %1185 = vmatpush1.xpose.msra.mxu0 0.0
    %1186 = vmatprep.subr.mxu0 0.0
    %1187 = vmatpush1.xpose.msra.mxu0 0.0
    %1188 = vmatprep.subr.mxu0 0.0
    %1189 = vmatpush1.xpose.msra.mxu0 0.0
    %1190 = vmatprep.subr.mxu0 0.0
    %1191 = vmatpush1.xpose.msra.mxu0 0.0
    %1192 = vmatprep.subr.mxu0 0.0
    %1193 = vmatpush1.xpose.msra.mxu0 0.0
    %1194 = vmatprep.subr.mxu0 0.0
    %1195 = vmatpush1.xpose.msra.mxu0 0.0
    %1196 = vmatprep.subr.mxu0 0.0
    %1197 = vmatpush1.xpose.msra.mxu0 0.0
    %1198 = vmatprep.subr.mxu0 0.0
    %1199 = vmatpush1.xpose.msra.mxu0 0.0
    %1200 = vmatprep.subr.mxu0 0.0
    %1201 = vmatpush1.xpose.msra.mxu0 0.0
    %1202 = vmatprep.subr.mxu0 0.0
    %1203 = vmatpush1.xpose.msra.mxu0 0.0
    %1204 = vmatprep.subr.mxu0 0.0
    %1205 = vmatpush1.xpose.msra.mxu0 %v1174
    %1206 = vmatprep.subr.mxu0 0.0
    %1207 = vmatpush1.xpose.msra.mxu0 %v1171
    %1208 = vmatprep.subr.mxu0 0.0
    %1209 = vmatpush2.xpose.msra.mxu0 0.0
    %1210 = vmatprep.subr.mxu0 0.0
    %1211 = vmatpush2.xpose.msra.mxu0 0.0
    %1212 = vmatprep.subr.mxu0 0.0
    %1213 = vmatpush2.xpose.msra.mxu0 0.0
    %1214 = vmatprep.subr.mxu0 0.0
    %1215 = vmatpush2.xpose.msra.mxu0 0.0
    %1216 = vmatprep.subr.mxu0 0.0
    %1217 = vmatpush2.xpose.msra.mxu0 0.0
    %1218 = vmatprep.subr.mxu0 0.0
    %1219 = vmatpush2.xpose.msra.mxu0 0.0
    %1220 = vmatprep.subr.mxu0 0.0
    %1221 = vmatpush2.xpose.msra.mxu0 0.0
    %1222 = vmatprep.subr.mxu0 0.0
    %1223 = vmatpush2.xpose.msra.mxu0 0.0
    %1224 = vmatprep.subr.mxu0 0.0
    %1225 = vmatpush2.xpose.msra.mxu0 0.0
    %1226 = vmatprep.subr.mxu0 0.0
    %1227 = vmatpush2.xpose.msra.mxu0 0.0
    %1228 = vmatprep.subr.mxu0 0.0
    %1229 = vmatpush2.xpose.msra.mxu0 0.0
    %1230 = vmatprep.subr.mxu0 0.0
    %1231 = vmatpush2.xpose.msra.mxu0 0.0
    %1232 = vmatprep.subr.mxu0 0.0
    %1233 = vmatpush2.xpose.msra.mxu0 0.0
    %1234 = vmatprep.subr.mxu0 0.0
    %1235 = vmatpush2.xpose.msra.mxu0 0.0
    %1236 = vmatprep.subr.mxu0 0.0
    %1237 = vmatpush2.xpose.msra.mxu0 0.0
    %1238 = vmatprep.subr.mxu0 0.0
    %1239 = vmatpush2.xpose.msra.mxu0 0.0
    %1240 = vmatprep.mubr.f32.mxu0 0.0
    %1241 = vmatmul.mubr.f32.gmra.mxu0 %v1147
    %v1242 = vpop.f32.mrf.mxu0
    %v1243 = vadd.f32 %v102, %v1242
    %v1244 = vpop.f32.mrf.mxu0
    %1245 = vmatprep.mubr.f32.mxu0 0.0
    %1246 = vmatmul.mubr.f32.gmra.mxu0 %v1150
    %v1247 = vpop.f32.mrf.mxu0
    %v1248 = vadd.f32 %v103, %v1247
    %v1249 = vpop.f32.mrf.mxu0
    %1250 = vmatprep.mubr.f32.mxu0 0.0
    %1251 = vmatmul.mubr.f32.gmra.mxu0 %v1153
    %v1252 = vpop.f32.mrf.mxu0
    %v1253 = vadd.f32 %v104, %v1252
    %v1254 = vpop.f32.mrf.mxu0
    %1255 = vmatprep.mubr.f32.mxu0 0.0
    %1256 = vmatmul.mubr.f32.gmra.mxu0 %v1156
    %v1257 = vpop.f32.mrf.mxu0
    %v1258 = vadd.f32 %v105, %v1257
    %v1259 = vpop.f32.mrf.mxu0
    %1260 = vmatprep.mubr.f32.mxu0 0.0
    %1261 = vmatmul.mubr.f32.gmra.mxu0 %v1159
    %v1262 = vpop.f32.mrf.mxu0
    %v1263 = vadd.f32 %v106, %v1262
    %v1264 = vpop.f32.mrf.mxu0
    %1265 = vmatprep.mubr.f32.mxu0 0.0
    %1266 = vmatmul.mubr.f32.gmra.mxu0 %v1162
    %v1267 = vpop.f32.mrf.mxu0
    %v1268 = vadd.f32 %v107, %v1267
    %v1269 = vpop.f32.mrf.mxu0
    %1270 = vmatprep.mubr.f32.mxu0 0.0
    %1271 = vmatmul.mubr.f32.gmra.mxu0 %v1165
    %v1272 = vpop.f32.mrf.mxu0
    %v1273 = vadd.f32 %v108, %v1272
    %v1274 = vpop.f32.mrf.mxu0
    %1275 = vmatprep.mubr.f32.mxu0 0.0
    %1276 = vmatmul.mubr.f32.gmra.mxu0 %v1168
    %v1277 = vpop.f32.mrf.mxu0
    %v1278 = vadd.f32 %v109, %v1277
    %v1279 = vpop.f32.mrf.mxu0
    %1280 = vdwg.mxu0
    %v1281 = vsel %vm522, %v1243, -inf
    %1282 = vmax.xlane.f32.xlu0 %v1281
    %v1283 = vpop.xlane.xlu0 %1282
    %v1284 = vsel %vm522, %v1248, -inf
    %1285 = vmax.xlane.f32.xlu0 %v1284
    %v1286 = vpop.xlane.xlu0 %1285
    %v1287 = vsel %vm522, %v1253, -inf
    %1288 = vmax.xlane.f32.xlu0 %v1287
    %v1289 = vpop.xlane.xlu0 %1288
    %v1290 = vsel %vm522, %v1258, -inf
    %1291 = vmax.xlane.f32.xlu0 %v1290
    %v1292 = vpop.xlane.xlu0 %1291
    %v1293 = vsel %vm522, %v1263, -inf
    %1294 = vmax.xlane.f32.xlu0 %v1293
    %v1295 = vpop.xlane.xlu0 %1294
    %v1296 = vsel %vm522, %v1268, -inf
    %1297 = vmax.xlane.f32.xlu0 %v1296
    %v1298 = vpop.xlane.xlu0 %1297
    %v1299 = vsel %vm522, %v1273, -inf
    %1300 = vmax.xlane.f32.xlu0 %v1299
    %v1301 = vpop.xlane.xlu0 %1300
    %v1302 = vsel %vm522, %v1278, -inf
    %1303 = vmax.xlane.f32.xlu0 %v1302
    %v1304 = vpop.xlane.xlu0 %1303
    %v1305 = vsub.f32 %v1243, %v1283
    %v1306 = vsub.f32 %v1248, %v1286
    %v1307 = vsub.f32 %v1253, %v1289
    %v1308 = vsub.f32 %v1258, %v1292
    %v1309 = vsub.f32 %v1263, %v1295
    %v1310 = vsub.f32 %v1268, %v1298
    %v1311 = vsub.f32 %v1273, %v1301
    %v1312 = vsub.f32 %v1278, %v1304
    %v1313 = vmul.f32 %v1305, 1.442695
    %v1314 = vpow.pop %v1313
    %v1315 = vmul.f32 %v1306, 1.442695
    %v1316 = vpow.pop %v1315
    %v1317 = vmul.f32 %v1307, 1.442695
    %v1318 = vpow.pop %v1317
    %v1319 = vmul.f32 %v1308, 1.442695
    %v1320 = vpow.pop %v1319
    %v1321 = vmul.f32 %v1309, 1.442695
    %v1322 = vpow.pop %v1321
    %v1323 = vmul.f32 %v1310, 1.442695
    %v1324 = vpow.pop %v1323
    %v1325 = vmul.f32 %v1311, 1.442695
    %v1326 = vpow.pop %v1325
    %v1327 = vmul.f32 %v1312, 1.442695
    %v1328 = vpow.pop %v1327
    %v1329 = vsel %vm522, %v1314, 0.0
    %1330 = vadd.xlane.f32.xlu0 %v1329
    %v1331 = vpop.xlane.xlu0 %1330
    %v1332 = vsel %vm522, %v1316, 0.0
    %1333 = vadd.xlane.f32.xlu0 %v1332
    %v1334 = vpop.xlane.xlu0 %1333
    %v1335 = vsel %vm522, %v1318, 0.0
    %1336 = vadd.xlane.f32.xlu0 %v1335
    %v1337 = vpop.xlane.xlu0 %1336
    %v1338 = vsel %vm522, %v1320, 0.0
    %1339 = vadd.xlane.f32.xlu0 %v1338
    %v1340 = vpop.xlane.xlu0 %1339
    %v1341 = vsel %vm522, %v1322, 0.0
    %1342 = vadd.xlane.f32.xlu0 %v1341
    %v1343 = vpop.xlane.xlu0 %1342
    %v1344 = vsel %vm522, %v1324, 0.0
    %1345 = vadd.xlane.f32.xlu0 %v1344
    %v1346 = vpop.xlane.xlu0 %1345
    %v1347 = vsel %vm522, %v1326, 0.0
    %1348 = vadd.xlane.f32.xlu0 %v1347
    %v1349 = vpop.xlane.xlu0 %1348
    %v1350 = vsel %vm522, %v1328, 0.0
    %1351 = vadd.xlane.f32.xlu0 %v1350
    %v1352 = vpop.xlane.xlu0 %1351
    %v1353 = vrcp.pop %v1331
    %v1354 = vrcp.pop %v1334
    %v1355 = vrcp.pop %v1337
    %v1356 = vrcp.pop %v1340
    %v1357 = vrcp.pop %v1343
    %v1358 = vrcp.pop %v1346
    %v1359 = vrcp.pop %v1349
    %v1360 = vrcp.pop %v1352
    %v1361 = vmul.f32 %v1331, %v1353
    %v1362 = vmul.f32 %v1334, %v1354
    %v1363 = vmul.f32 %v1337, %v1355
    %v1364 = vmul.f32 %v1340, %v1356
    %v1365 = vmul.f32 %v1343, %v1357
    %v1366 = vmul.f32 %v1346, %v1358
    %v1367 = vmul.f32 %v1349, %v1359
    %v1368 = vmul.f32 %v1352, %v1360
    %v1369 = vsub.f32 2.0, %v1361
    %v1370 = vsub.f32 2.0, %v1362
    %v1371 = vsub.f32 2.0, %v1363
    %v1372 = vsub.f32 2.0, %v1364
    %v1373 = vsub.f32 2.0, %v1365
    %v1374 = vsub.f32 2.0, %v1366
    %v1375 = vsub.f32 2.0, %v1367
    %v1376 = vsub.f32 2.0, %v1368
    %v1377 = vmul.f32 %v1353, %v1369
    %v1378 = vmul.f32 %v1354, %v1370
    %v1379 = vmul.f32 %v1355, %v1371
    %v1380 = vmul.f32 %v1356, %v1372
    %v1381 = vmul.f32 %v1357, %v1373
    %v1382 = vmul.f32 %v1358, %v1374
    %v1383 = vmul.f32 %v1359, %v1375
    %v1384 = vmul.f32 %v1360, %v1376
    %v1385 = vmul.f32 %v1314, %v1377
    %v1386 = vmul.f32 %v1316, %v1378
    %v1387 = vmul.f32 %v1318, %v1379
    %v1388 = vmul.f32 %v1320, %v1380
    %v1389 = vmul.f32 %v1322, %v1381
    %v1390 = vmul.f32 %v1324, %v1382
    %v1391 = vmul.f32 %v1326, %v1383
    %v1392 = vmul.f32 %v1328, %v1384
    %v1394 = vsel %vm522, %v1385, 0
    %v1397 = vsel %vm522, %v1386, 0
    %v1400 = vsel %vm522, %v1387, 0
    %v1403 = vsel %vm522, %v1388, 0
    %v1406 = vsel %vm522, %v1389, 0
    %v1409 = vsel %vm522, %v1390, 0
    %v1412 = vsel %vm522, %v1391, 0
    %v1415 = vsel %vm522, %v1392, 0
    %1417 = vmatprep.subr.mxu0 0.0
    %1418 = vmatpush1.msra.mxu0 0.0
    %1419 = vmatprep.subr.mxu0 0.0
    %1420 = vmatpush1.msra.mxu0 0.0
    %1421 = vmatprep.subr.mxu0 0.0
    %1422 = vmatpush1.msra.mxu0 0.0
    %1423 = vmatprep.subr.mxu0 0.0
    %1424 = vmatpush1.msra.mxu0 0.0
    %1425 = vmatprep.subr.mxu0 0.0
    %1426 = vmatpush1.msra.mxu0 0.0
    %1427 = vmatprep.subr.mxu0 0.0
    %1428 = vmatpush1.msra.mxu0 0.0
    %1429 = vmatprep.subr.mxu0 0.0
    %1430 = vmatpush1.msra.mxu0 0.0
    %1431 = vmatprep.subr.mxu0 0.0
    %1432 = vmatpush1.msra.mxu0 0.0
    %1433 = vmatprep.subr.mxu0 0.0
    %1434 = vmatpush1.msra.mxu0 0.0
    %1435 = vmatprep.subr.mxu0 0.0
    %1436 = vmatpush1.msra.mxu0 0.0
    %1437 = vmatprep.subr.mxu0 0.0
    %1438 = vmatpush1.msra.mxu0 0.0
    %1439 = vmatprep.subr.mxu0 0.0
    %1440 = vmatpush1.msra.mxu0 0.0
    %1441 = vmatprep.subr.mxu0 0.0
    %1442 = vmatpush1.msra.mxu0 0.0
    %1443 = vmatprep.subr.mxu0 0.0
    %1444 = vmatpush1.msra.mxu0 0.0
    %1445 = vmatprep.subr.mxu0 0.0
    %1446 = vmatpush1.msra.mxu0 %v1135
    %1447 = vmatprep.subr.mxu0 0.0
    %1448 = vmatpush1.msra.mxu0 %v1130
    %1449 = vmatprep.subr.mxu0 0.0
    %1450 = vmatpush2.msra.mxu0 0.0
    %1451 = vmatprep.subr.mxu0 0.0
    %1452 = vmatpush2.msra.mxu0 0.0
    %1453 = vmatprep.subr.mxu0 0.0
    %1454 = vmatpush2.msra.mxu0 0.0
    %1455 = vmatprep.subr.mxu0 0.0
    %1456 = vmatpush2.msra.mxu0 0.0
    %1457 = vmatprep.subr.mxu0 0.0
    %1458 = vmatpush2.msra.mxu0 0.0
    %1459 = vmatprep.subr.mxu0 0.0
    %1460 = vmatpush2.msra.mxu0 0.0
    %1461 = vmatprep.subr.mxu0 0.0
    %1462 = vmatpush2.msra.mxu0 0.0
    %1463 = vmatprep.subr.mxu0 0.0
    %1464 = vmatpush2.msra.mxu0 0.0
    %1465 = vmatprep.subr.mxu0 0.0
    %1466 = vmatpush2.msra.mxu0 0.0
    %1467 = vmatprep.subr.mxu0 0.0
    %1468 = vmatpush2.msra.mxu0 0.0
    %1469 = vmatprep.subr.mxu0 0.0
    %1470 = vmatpush2.msra.mxu0 0.0
    %1471 = vmatprep.subr.mxu0 0.0
    %1472 = vmatpush2.msra.mxu0 0.0
    %1473 = vmatprep.subr.mxu0 0.0
    %1474 = vmatpush2.msra.mxu0 0.0
    %1475 = vmatprep.subr.mxu0 0.0
    %1476 = vmatpush2.msra.mxu0 0.0
    %1477 = vmatprep.subr.mxu0 0.0
    %1478 = vmatpush2.msra.mxu0 0.0
    %1479 = vmatprep.subr.mxu0 0.0
    %1480 = vmatpush2.msra.mxu0 0.0
    %1481 = vmatprep.mubr.f32.mxu0 0.0
    %1482 = vmatmul.mubr.f32.gmra.mxu0 %v1394
    %v1483 = vpop.f32.mrf.mxu0
    %v1484 = vadd.f32 0.0, %v1483
    %v1485 = vpop.f32.mrf.mxu0
    %1486 = vmatprep.mubr.f32.mxu0 0.0
    %1487 = vmatmul.mubr.f32.gmra.mxu0 %v1397
    %v1488 = vpop.f32.mrf.mxu0
    %v1489 = vadd.f32 0.0, %v1488
    %v1490 = vpop.f32.mrf.mxu0
    %1491 = vmatprep.mubr.f32.mxu0 0.0
    %1492 = vmatmul.mubr.f32.gmra.mxu0 %v1400
    %v1493 = vpop.f32.mrf.mxu0
    %v1494 = vadd.f32 0.0, %v1493
    %v1495 = vpop.f32.mrf.mxu0
    %1496 = vmatprep.mubr.f32.mxu0 0.0
    %1497 = vmatmul.mubr.f32.gmra.mxu0 %v1403
    %v1498 = vpop.f32.mrf.mxu0
    %v1499 = vadd.f32 0.0, %v1498
    %v1500 = vpop.f32.mrf.mxu0
    %1501 = vmatprep.mubr.f32.mxu0 0.0
    %1502 = vmatmul.mubr.f32.gmra.mxu0 %v1406
    %v1503 = vpop.f32.mrf.mxu0
    %v1504 = vadd.f32 0.0, %v1503
    %v1505 = vpop.f32.mrf.mxu0
    %1506 = vmatprep.mubr.f32.mxu0 0.0
    %1507 = vmatmul.mubr.f32.gmra.mxu0 %v1409
    %v1508 = vpop.f32.mrf.mxu0
    %v1509 = vadd.f32 0.0, %v1508
    %v1510 = vpop.f32.mrf.mxu0
    %1511 = vmatprep.mubr.f32.mxu0 0.0
    %1512 = vmatmul.mubr.f32.gmra.mxu0 %v1412
    %v1513 = vpop.f32.mrf.mxu0
    %v1514 = vadd.f32 0.0, %v1513
    %v1515 = vpop.f32.mrf.mxu0
    %1516 = vmatprep.mubr.f32.mxu0 0.0
    %1517 = vmatmul.mubr.f32.gmra.mxu0 %v1415
    %v1518 = vpop.f32.mrf.mxu0
    %v1519 = vadd.f32 0.0, %v1518
    %v1520 = vpop.f32.mrf.mxu0
    %1521 = vdwg.mxu0
    %v1522 = vmul.f32 %v1484, %v85
    %v1523 = vmul.f32 %v1489, %v89
    %v1524 = vmul.f32 %v1494, %v93
    %v1525 = vmul.f32 %v1499, %v97
    %v1526 = vmul.f32 %v1504, %v85
    %v1527 = vmul.f32 %v1509, %v89
    %v1528 = vmul.f32 %v1514, %v93
    %v1529 = vmul.f32 %v1519, %v97
    %v1530 = vsel %vm139, %v1522, 0.0
    %v1531 = vsel %vm139, %v1523, 0.0
    %v1532 = vadd.f32 %v1530, %v1531
    %v1533 = vsel %vm139, %v1524, 0.0
    %v1534 = vadd.f32 %v1532, %v1533
    %v1535 = vsel %vm139, %v1525, 0.0
    %v1536 = vadd.f32 %v1534, %v1535
    %v1537 = vsel %vm139, %v1526, 0.0
    %v1538 = vsel %vm139, %v1527, 0.0
    %v1539 = vadd.f32 %v1537, %v1538
    %v1540 = vsel %vm139, %v1528, 0.0
    %v1541 = vadd.f32 %v1539, %v1540
    %v1542 = vsel %vm139, %v1529, 0.0
    %v1543 = vadd.f32 %v1541, %v1542
    %v1544 = vlaneseq
    %v1545 = vshrl.u32 %v1544, 7
    %v1546 = vsub.s32 0, %v1545
    %v1547 = vrot.slane %v894, %v1546
    %v1549 = vsel %vm139, %v1536, 0
    %v1552 = vsel %vm139, %v1543, 0
    %1554 = vmatprep.subr.mxu0 0.0
    %1555 = vmatpush1.msra.mxu0 0.0
    %1556 = vmatprep.subr.mxu0 0.0
    %1557 = vmatpush1.msra.mxu0 0.0
    %1558 = vmatprep.subr.mxu0 0.0
    %1559 = vmatpush1.msra.mxu0 0.0
    %1560 = vmatprep.subr.mxu0 0.0
    %1561 = vmatpush1.msra.mxu0 0.0
    %1562 = vmatprep.subr.mxu0 0.0
    %1563 = vmatpush1.msra.mxu0 0.0
    %1564 = vmatprep.subr.mxu0 0.0
    %1565 = vmatpush1.msra.mxu0 0.0
    %1566 = vmatprep.subr.mxu0 0.0
    %1567 = vmatpush1.msra.mxu0 0.0
    %1568 = vmatprep.subr.mxu0 0.0
    %1569 = vmatpush1.msra.mxu0 0.0
    %1570 = vmatprep.subr.mxu0 0.0
    %1571 = vmatpush1.msra.mxu0 0.0
    %1572 = vmatprep.subr.mxu0 0.0
    %1573 = vmatpush1.msra.mxu0 0.0
    %1574 = vmatprep.subr.mxu0 0.0
    %1575 = vmatpush1.msra.mxu0 0.0
    %1576 = vmatprep.subr.mxu0 0.0
    %1577 = vmatpush1.msra.mxu0 0.0
    %1578 = vmatprep.subr.mxu0 0.0
    %1579 = vmatpush1.msra.mxu0 %v890
    %1580 = vmatprep.subr.mxu0 0.0
    %1581 = vmatpush1.msra.mxu0 %v889
    %1582 = vmatprep.subr.mxu0 0.0
    %1583 = vmatpush1.msra.mxu0 %v888
    %1584 = vmatprep.subr.mxu0 0.0
    %1585 = vmatpush1.msra.mxu0 %v887
    %1586 = vmatprep.subr.mxu0 0.0
    %1587 = vmatpush2.msra.mxu0 0.0
    %1588 = vmatprep.subr.mxu0 0.0
    %1589 = vmatpush2.msra.mxu0 0.0
    %1590 = vmatprep.subr.mxu0 0.0
    %1591 = vmatpush2.msra.mxu0 0.0
    %1592 = vmatprep.subr.mxu0 0.0
    %1593 = vmatpush2.msra.mxu0 0.0
    %1594 = vmatprep.subr.mxu0 0.0
    %1595 = vmatpush2.msra.mxu0 0.0
    %1596 = vmatprep.subr.mxu0 0.0
    %1597 = vmatpush2.msra.mxu0 0.0
    %1598 = vmatprep.subr.mxu0 0.0
    %1599 = vmatpush2.msra.mxu0 0.0
    %1600 = vmatprep.subr.mxu0 0.0
    %1601 = vmatpush2.msra.mxu0 0.0
    %1602 = vmatprep.subr.mxu0 0.0
    %1603 = vmatpush2.msra.mxu0 0.0
    %1604 = vmatprep.subr.mxu0 0.0
    %1605 = vmatpush2.msra.mxu0 0.0
    %1606 = vmatprep.subr.mxu0 0.0
    %1607 = vmatpush2.msra.mxu0 0.0
    %1608 = vmatprep.subr.mxu0 0.0
    %1609 = vmatpush2.msra.mxu0 0.0
    %1610 = vmatprep.subr.mxu0 0.0
    %1611 = vmatpush2.msra.mxu0 0.0
    %1612 = vmatprep.subr.mxu0 0.0
    %1613 = vmatpush2.msra.mxu0 0.0
    %1614 = vmatprep.subr.mxu0 0.0
    %1615 = vmatpush2.msra.mxu0 0.0
    %1616 = vmatprep.subr.mxu0 0.0
    %1617 = vmatpush2.msra.mxu0 0.0
    %1618 = vmatprep.mubr.f32.mxu0 0.0
    %1619 = vmatmul.mubr.f32.gmra.mxu0 %v1549
    %v1620 = vpop.f32.mrf.mxu0
    %v1621 = vadd.f32 %v1547, %v1620
    %v1622 = vpop.f32.mrf.mxu0
    %1623 = vmatprep.mubr.f32.mxu0 0.0
    %1624 = vmatmul.mubr.f32.gmra.mxu0 %v1552
    %v1625 = vpop.f32.mrf.mxu0
    %v1626 = vadd.f32 %v1547, %v1625
    %v1627 = vpop.f32.mrf.mxu0
    %1628 = vdwg.mxu0
    %v1629 = vsel %vm139, %v1621, 0.0
    %v1630 = vsel %vm139, %v1626, 0.0
    %v1631 = vadd.f32 %v1629, %v1630
    %v1632 = vrcp.pop 2.0
    %v1633 = vmul.f32 %v1631, %v1632
    %v1634 = vld [vmem:[#allocation7 + $0x50] sm:$0xff]
    %v1635 = vld [vmem:[#allocation7 + $0x58] sm:$0xff]
    %v1636 = vld [vmem:[#allocation7 + $0x60] sm:$0xff]
    %v1637 = vld [vmem:[#allocation7 + $0x68] sm:$0xff]
    %v1638 = vld [vmem:[#allocation7 + $0x70] sm:$0x1]
    %v1639 = vlaneseq
    %v1640 = vshrl.u32 %v1639, 7
    %v1641 = vsub.s32 0, %v1640
    %v1642 = vrot.slane %v1638, %v1641
    %v1644 = vsel %vm139, %v1633, 0
    %1646 = vmatprep.subr.mxu0 0.0
    %1647 = vmatpush1.msra.mxu0 0.0
    %1648 = vmatprep.subr.mxu0 0.0
    %1649 = vmatpush1.msra.mxu0 0.0
    %1650 = vmatprep.subr.mxu0 0.0
    %1651 = vmatpush1.msra.mxu0 0.0
    %1652 = vmatprep.subr.mxu0 0.0
    %1653 = vmatpush1.msra.mxu0 0.0
    %1654 = vmatprep.subr.mxu0 0.0
    %1655 = vmatpush1.msra.mxu0 0.0
    %1656 = vmatprep.subr.mxu0 0.0
    %1657 = vmatpush1.msra.mxu0 0.0
    %1658 = vmatprep.subr.mxu0 0.0
    %1659 = vmatpush1.msra.mxu0 0.0
    %1660 = vmatprep.subr.mxu0 0.0
    %1661 = vmatpush1.msra.mxu0 0.0
    %1662 = vmatprep.subr.mxu0 0.0
    %1663 = vmatpush1.msra.mxu0 0.0
    %1664 = vmatprep.subr.mxu0 0.0
    %1665 = vmatpush1.msra.mxu0 0.0
    %1666 = vmatprep.subr.mxu0 0.0
    %1667 = vmatpush1.msra.mxu0 0.0
    %1668 = vmatprep.subr.mxu0 0.0
    %1669 = vmatpush1.msra.mxu0 0.0
    %1670 = vmatprep.subr.mxu0 0.0
    %1671 = vmatpush1.msra.mxu0 %v1637
    %1672 = vmatprep.subr.mxu0 0.0
    %1673 = vmatpush1.msra.mxu0 %v1636
    %1674 = vmatprep.subr.mxu0 0.0
    %1675 = vmatpush1.msra.mxu0 %v1635
    %1676 = vmatprep.subr.mxu0 0.0
    %1677 = vmatpush1.msra.mxu0 %v1634
    %1678 = vmatprep.subr.mxu0 0.0
    %1679 = vmatpush2.msra.mxu0 0.0
    %1680 = vmatprep.subr.mxu0 0.0
    %1681 = vmatpush2.msra.mxu0 0.0
    %1682 = vmatprep.subr.mxu0 0.0
    %1683 = vmatpush2.msra.mxu0 0.0
    %1684 = vmatprep.subr.mxu0 0.0
    %1685 = vmatpush2.msra.mxu0 0.0
    %1686 = vmatprep.subr.mxu0 0.0
    %1687 = vmatpush2.msra.mxu0 0.0
    %1688 = vmatprep.subr.mxu0 0.0
    %1689 = vmatpush2.msra.mxu0 0.0
    %1690 = vmatprep.subr.mxu0 0.0
    %1691 = vmatpush2.msra.mxu0 0.0
    %1692 = vmatprep.subr.mxu0 0.0
    %1693 = vmatpush2.msra.mxu0 0.0
    %1694 = vmatprep.subr.mxu0 0.0
    %1695 = vmatpush2.msra.mxu0 0.0
    %1696 = vmatprep.subr.mxu0 0.0
    %1697 = vmatpush2.msra.mxu0 0.0
    %1698 = vmatprep.subr.mxu0 0.0
    %1699 = vmatpush2.msra.mxu0 0.0
    %1700 = vmatprep.subr.mxu0 0.0
    %1701 = vmatpush2.msra.mxu0 0.0
    %1702 = vmatprep.subr.mxu0 0.0
    %1703 = vmatpush2.msra.mxu0 0.0
    %1704 = vmatprep.subr.mxu0 0.0
    %1705 = vmatpush2.msra.mxu0 0.0
    %1706 = vmatprep.subr.mxu0 0.0
    %1707 = vmatpush2.msra.mxu0 0.0
    %1708 = vmatprep.subr.mxu0 0.0
    %1709 = vmatpush2.msra.mxu0 0.0
    %1710 = vmatprep.mubr.f32.mxu0 0.0
    %1711 = vmatmul.mubr.f32.gmra.mxu0 %v1644
    %v1712 = vpop.f32.mrf.mxu0
    %v1713 = vadd.f32 %v1642, %v1712
    %v1714 = vpop.f32.mrf.mxu0
    %1715 = vdwg.mxu0
    %1716 = vst [vmem:[#allocation8] sm:$0xff] %v1713
    // Predicated region
    $region26: #{tpu_custom_call.1} parent=1 // pred_check
      _
    $region27: #{tpu_custom_call.1} parent=1 // pred_check_branch
      %1718 = sbr.rel (0) target = $region29
    $region28: #{tpu_custom_call.1} parent=1 // pred_region
      %s1720 = ssub.s32 128, 128
      %1721 = vsyncadd [#allocation4], %s1720
      %s1723 = sshll.u32 [#allocation8], 4
      %s1724 = int_to_ptr.vmem [resolvable:$true] %s1723
      %1726 = dma.vmem_to_hbm [thread:$0]  %s1724, 128, %s3, [#allocation4]
    $region29: #{tpu_custom_call.1} parent=1 // pred_fallthru
      _
    // Predicated region
    $region30: #{tpu_custom_call.1} parent=1 // pred_check
      _
    $region31: #{tpu_custom_call.1} parent=1 // pred_check_branch
      %1728 = sbr.rel (0) target = $region33
    $region32: #{tpu_custom_call.1} parent=1 // pred_region
      %1729 = dma.done [#allocation4], 128
    $region33: #{tpu_custom_call.1} parent=1 // pred_fallthru
      _
    %1730 = vsyncpa [#allocation3], 1
    %1731 = vsyncpa [#allocation6], 1
    %1732 = vsyncpa [#allocation4], 1

</llo_original>
